<compile_context>
chip_gen: v5e
topology: v5e:2x2
jax: 0.10.0
libtpu: 0.0.40
codegen_flags: <defaults>
</compile_context>

<pallas_src>
import functools
import math

import jax
import jax.numpy as jnp
from jax.experimental import pallas as pl
from jax.experimental.pallas import tpu as pltpu

# ---- DefaultHyperParams (small, deterministic, consistent with the module) ----
IN_FEATURE_DIM = 4
HIDDEN         = 32          # transformer_hidden_dim
N_HEADS        = 4           # transformer_n_heads
HEAD_DIM       = HIDDEN // N_HEADS
FF_DIM         = 64          # transformer_feed_forward_dim
N_LAYERS       = 2           # transformer_n_layers
ACTOR_DIM      = 32          # == HIDDEN so actor layers can be stacked
ACTOR_LAYERS   = 2
CRITIC_DIM     = 32          # == HIDDEN so critic layers can be stacked
CRITIC_LAYERS  = 2
SEQ            = 8           # feature_dim // in_feature_dim
FEATURE_DIM    = SEQ * IN_FEATURE_DIM
S1             = SEQ + 1     # +1 for CLS token
EPS            = 1e-5
BATCH          = 2
HEAD_OUT       = ACTOR_DIM + CRITIC_DIM      # 64 real output lanes
OUT_PAD        = 128                          # lane-dense (unmasked) store width

assert ACTOR_LAYERS == CRITIC_LAYERS, "head fusion assumes equal depth actor/critic"
assert ACTOR_DIM == HIDDEN and CRITIC_DIM == HIDDEN


def _layer_norm(v, w, b):
    mu = jnp.mean(v, axis=-1, keepdims=True)
    var = jnp.mean((v - mu) ** 2, axis=-1, keepdims=True)
    return (v - mu) * jax.lax.rsqrt(var + EPS) * w + b


def cls_transformer_kernel(
    feat_ref,     # (bs1, IN_F)   f32   token features, CLS rows zeroed
    conv_wT_ref,  # (IN_F, H)     bf16  Conv1d(k=1) weight, pre-transposed
    addc_ref,     # (bs1, H)      f32   row0-of-each-example: cls+pos[0]; else conv_b+pos[t]
    exid_r_ref,   # (bs1, 1)      i32   example id per token (row form)
    exid_c_ref,   # (1, bs1)      i32   example id per token (column form)
    cls_sel_ref,  # (b_tile, bs1) f32   one-hot CLS-row gather matrix
    wqkvT_ref,    # (L, H, 3H)    bf16  fused in_proj weight, pre-transposed, Q pre-scaled
    bqkv_ref,     # (L, 1, 3H)    f32   fused in_proj bias, Q pre-scaled
    woT_ref,      # (L, H, H)     bf16
    w1T_ref,      # (L, H, FF)    bf16
    b1_ref,       # (L, 1, FF)    f32
    w2T_ref,      # (L, FF, H)    bf16
    lnb_ref,      # (L, 6, H)     f32  rows: [out_b, ffn2_b, ln1_w, ln1_b, ln2_w, ln2_b]
    hw0_ref,      # (H, OUT_PAD)  bf16 fused actor/critic first layer (lane-padded)
    hwr_ref,      # (HL-1, OUT_PAD, OUT_PAD) bf16 block-diag actor/critic layers
    hb_ref,       # (HL, 1, OUT_PAD) f32
    out_ref,      # (b_tile, OUT_PAD) f32
):
    f32 = jnp.float32
    bf16 = jnp.bfloat16
    bs1 = feat_ref.shape[0]            # static at trace time

    # ---- In-kernel constants (replace the big host-side constant inputs) ----
    # Block-diagonal attention mask: tokens only attend within their own example.
    same_ex = exid_r_ref[...] == exid_c_ref[...]                       # (bs1, bs1) bool
    neg_big = jnp.float32(-1e9)

    # Per-head lane masks from a lane iota (no (N_HEADS,1,H) input needed).
    lane = jax.lax.broadcasted_iota(jnp.int32, (1, HIDDEN), 1)
    hmask = [((lane >= h * HEAD_DIM) & (lane < (h + 1) * HEAD_DIM)).astype(f32)
             for h in range(N_HEADS)]

    # Conv1d(k=1) over all tokens + folded (cls / positional / conv-bias) constant.
    x = jnp.dot(feat_ref[...].astype(bf16), conv_wT_ref[...],
                preferred_element_type=f32) + addc_ref[...]            # (bs1, H) f32

    for l in range(N_LAYERS):
        lnb = lnb_ref[l]                                               # (6, H)

        # Fused QKV projection (Q columns already pre-scaled by 1/sqrt(HEAD_DIM)).
        qkv = jnp.dot(x.astype(bf16), wqkvT_ref[l],
                      preferred_element_type=f32) + bqkv_ref[l]        # (bs1, 3H)
        q = qkv[:, 0 * HIDDEN:1 * HIDDEN]
        k = qkv[:, 1 * HIDDEN:2 * HIDDEN]
        v = qkv[:, 2 * HIDDEN:3 * HIDDEN]
        k_bf = k.astype(bf16)

        # Multi-head attention with lane masks: per-head outputs land in disjoint
        # lanes, so their sum IS the head concatenation.
        heads = jnp.zeros((bs1, HIDDEN), f32)
        for h in range(N_HEADS):
            m = hmask[h]                                               # (1, H) f32
            s = jax.lax.dot_general((q * m).astype(bf16), k_bf,
                                    (((1,), (1,)), ((), ())),
                                    preferred_element_type=f32)        # (bs1, bs1) f32
            s = jnp.where(same_ex, s, neg_big)
            s = s - jnp.max(s, axis=-1, keepdims=True)
            p = jnp.exp(s)
            p = p * pl.reciprocal(jnp.sum(p, axis=-1, keepdims=True), approx=True)
            heads = heads + jnp.dot(p.astype(bf16), (v * m).astype(bf16),
                                    preferred_element_type=f32)

        # Single output projection on the concatenated heads.
        attn_out = jnp.dot(heads.astype(bf16), woT_ref[l],
                           preferred_element_type=f32) + lnb[0:1, :]

        # post-LN residual blocks (dropout disabled == eval mode)
        x = _layer_norm(x + attn_out, lnb[2:3, :], lnb[3:4, :])
        ff = jnp.maximum(jnp.dot(x.astype(bf16), w1T_ref[l],
                                 preferred_element_type=f32) + b1_ref[l], 0.0)
        ff = jnp.dot(ff.astype(bf16), w2T_ref[l],
                     preferred_element_type=f32) + lnb[1:2, :]
        x = _layer_norm(x + ff, lnb[4:5, :], lnb[5:6, :])

    # Exact CLS-row gather via a one-hot matmul (kept in f32; it is a pure selection).
    cls = jnp.dot(cls_sel_ref[...], x, preferred_element_type=f32)     # (b_tile, H)

    # Fused actor+critic MLP, lane-padded to 128 output lanes (unmasked store).
    lat = jnp.maximum(jnp.dot(cls.astype(bf16), hw0_ref[...],
                              preferred_element_type=f32) + hb_ref[0], 0.0)
    for i in range(1, ACTOR_LAYERS):
        lat = jnp.maximum(jnp.dot(lat.astype(bf16), hwr_ref[i - 1],
                                  preferred_element_type=f32) + hb_ref[i], 0.0)
    out_ref[...] = lat


def _const_spec(shape):
    zeros = (0,) * len(shape)
    return pl.BlockSpec(shape, lambda t, _z=zeros: _z)


def pack_params(p, b_tile):
    """Host-side repack: pre-transpose, pre-cast to bf16, fold the softmax scale into Q,
    fuse cls/pos/conv-bias adds, fuse + lane-pad the actor/critic heads."""
    bf16 = jnp.bfloat16
    f32 = jnp.float32
    bs1 = b_tile * S1
    scale = 1.0 / math.sqrt(HEAD_DIM)

    pos = p["pos"]
    addc_one = jnp.concatenate([p["cls"] + pos[0:1], p["conv_b"] + pos[1:]], axis=0)  # (S1,H)
    addc = jnp.tile(addc_one, (b_tile, 1)).astype(f32)                                # (bs1,H)

    ex = jnp.repeat(jnp.arange(b_tile, dtype=jnp.int32), S1)                          # (bs1,)
    exid_r = ex.reshape(bs1, 1)
    exid_c = ex.reshape(1, bs1)

    cls_sel = jnp.zeros((b_tile, bs1), f32)
    cls_sel = cls_sel.at[jnp.arange(b_tile), jnp.arange(b_tile) * S1].set(1.0)

    # Fold 1/sqrt(head_dim) into the Q output columns of the fused in_proj.
    q_scale = jnp.concatenate([jnp.full((HIDDEN,), scale, f32),
                               jnp.ones((2 * HIDDEN,), f32)], axis=0)                 # (3H,)
    wqkvT = jnp.transpose(p["ipw"], (0, 2, 1)) * q_scale[None, None, :]               # (L,H,3H)
    bqkv = p["ipb"] * q_scale[None, None, :]                                          # (L,1,3H)

    lnb = jnp.stack(
        [jnp.concatenate([p["opb"][l], p["l2b"][l], p["n1w"][l], p["n1b"][l],
                          p["n2w"][l], p["n2b"][l]], axis=0)
         for l in range(N_LAYERS)], axis=0)                                           # (L,6,H)

    # Fused + lane-padded actor/critic head (extra lanes are zero => free on MXU).
    hw0 = jnp.zeros((HIDDEN, OUT_PAD), f32)
    hw0 = hw0.at[:, :ACTOR_DIM].set(p["pw"][0].T)
    hw0 = hw0.at[:, ACTOR_DIM:HEAD_OUT].set(p["vw"][0].T)
    hb = jnp.zeros((ACTOR_LAYERS, 1, OUT_PAD), f32)
    hb = hb.at[:, :, :ACTOR_DIM].set(p["pb"])
    hb = hb.at[:, :, ACTOR_DIM:HEAD_OUT].set(p["vb"])
    blocks = []
    for i in range(1, ACTOR_LAYERS):
        blk = jnp.zeros((OUT_PAD, OUT_PAD), f32)
        blk = blk.at[:ACTOR_DIM, :ACTOR_DIM].set(p["pw"][i].T)
        blk = blk.at[ACTOR_DIM:HEAD_OUT, ACTOR_DIM:HEAD_OUT].set(p["vw"][i].T)
        blocks.append(blk)
    hwr = jnp.stack(blocks, axis=0)                                                   # (HL-1,128,128)

    return dict(
        conv_wT=p["conv_w"].T.astype(bf16),
        addc=addc, exid_r=exid_r, exid_c=exid_c, cls_sel=cls_sel,
        wqkvT=wqkvT.astype(bf16), bqkv=bqkv,
        woT=jnp.transpose(p["opw"], (0, 2, 1)).astype(bf16),
        w1T=jnp.transpose(p["l1w"], (0, 2, 1)).astype(bf16), b1=p["l1b"],
        w2T=jnp.transpose(p["l2w"], (0, 2, 1)).astype(bf16),
        lnb=lnb, hw0=hw0.astype(bf16), hwr=hwr.astype(bf16), hb=hb,
    )


@functools.partial(jax.jit, static_argnames=("b_tile",))
def cls_transformer_forward(features, params, b_tile=None):
    B = features.shape[0]
    if b_tile is None:
        # Adaptive tile: no padding waste for small batches; 8 keeps (8,128) divisibility
        # for the multi-tile path and gives >= 2 "parallel" grid steps once B >= 16.
        b_tile = B if B <= 8 else 8
    nb = -(-B // b_tile)
    Bp = nb * b_tile
    bs1 = b_tile * S1

    w = pack_params(params, b_tile)

    # Host-side layout: (B, SEQ, IN_F) -> pad batch -> prepend zero CLS row -> flatten tokens.
    feat = features.astype(jnp.float32).reshape(B, SEQ, IN_FEATURE_DIM)
    feat = jnp.pad(feat, ((0, Bp - B), (0, 0), (0, 0)))
    feat = jnp.concatenate(
        [jnp.zeros((Bp, 1, IN_FEATURE_DIM), jnp.float32), feat], axis=1)   # (Bp, S1, IN_F)
    feat2d = feat.reshape(Bp * S1, IN_FEATURE_DIM)

    weight_args = [w[k] for k in ("conv_wT", "addc", "exid_r", "exid_c", "cls_sel",
                                  "wqkvT", "bqkv", "woT", "w1T", "b1", "w2T",
                                  "lnb", "hw0", "hwr", "hb")]

    in_specs = [pl.BlockSpec((bs1, IN_FEATURE_DIM), lambda t: (t, 0))]
    in_specs += [_const_spec(a.shape) for a in weight_args]

    # Rough cost hint for XLA scheduling (advisory).
    macs = (bs1 * IN_FEATURE_DIM * HIDDEN
            + N_LAYERS * bs1 * HIDDEN * (3 * HIDDEN + HIDDEN + FF_DIM)
            + N_LAYERS * bs1 * FF_DIM * HIDDEN
            + N_LAYERS * N_HEADS * 2 * bs1 * bs1 * HIDDEN
            + b_tile * bs1 * HIDDEN
            + b_tile * (HIDDEN + (ACTOR_LAYERS - 1) * OUT_PAD) * OUT_PAD)
    weight_bytes = sum(int(a.size) * a.dtype.itemsize for a in weight_args)
    cost = pl.CostEstimate(
        flops=2 * macs * nb,
        transcendentals=nb * N_LAYERS * N_HEADS * bs1 * bs1,
        bytes_accessed=int(weight_bytes + feat2d.size * 4 + Bp * OUT_PAD * 4))

    out = pl.pallas_call(
        cls_transformer_kernel,
        out_shape=jax.ShapeDtypeStruct((Bp, OUT_PAD), jnp.float32),
        grid_spec=pltpu.PrefetchScalarGridSpec(
            num_scalar_prefetch=0,
            grid=(nb,),
            in_specs=in_specs,
            out_specs=pl.BlockSpec((b_tile, OUT_PAD), lambda t: (t, 0)),
        ),
        compiler_params=pltpu.CompilerParams(
            dimension_semantics=("parallel",)),
        cost_estimate=cost,
    )(feat2d, *weight_args)

    return out[:B, :ACTOR_DIM], out[:B, ACTOR_DIM:HEAD_OUT]


# ---------------------------- pure-JAX reference -------------------------------
def reference_forward(features, p):
    B = features.shape[0]
    t = features.reshape(B, SEQ, IN_FEATURE_DIM).astype(jnp.float32)
    h = jnp.einsum('bsi,hi->bsh', t, p["conv_w"]) + p["conv_b"]
    x = jnp.concatenate([jnp.broadcast_to(p["cls"], (B, 1, HIDDEN)), h], axis=1) + p["pos"]
    scale = 1.0 / math.sqrt(HEAD_DIM)
    for l in range(N_LAYERS):
        wqkv, bqkv = p["ipw"][l], p["ipb"][l]
        q = jnp.einsum('bsh,oh->bso', x, wqkv[:HIDDEN]) + bqkv[:, :HIDDEN]
        k = jnp.einsum('bsh,oh->bso', x, wqkv[HIDDEN:2 * HIDDEN]) + bqkv[:, HIDDEN:2 * HIDDEN]
        v = jnp.einsum('bsh,oh->bso', x, wqkv[2 * HIDDEN:]) + bqkv[:, 2 * HIDDEN:]
        qh = q.reshape(B, S1, N_HEADS, HEAD_DIM)
        kh = k.reshape(B, S1, N_HEADS, HEAD_DIM)
        vh = v.reshape(B, S1, N_HEADS, HEAD_DIM)
        s = jnp.einsum('bqnd,bknd->bnqk', qh, kh) * scale
        att = jax.nn.softmax(s, axis=-1)
        o = jnp.einsum('bnqk,bknd->bqnd', att, vh).reshape(B, S1, HIDDEN)
        attn = jnp.einsum('bsh,oh->bso', o, p["opw"][l]) + p["opb"][l]
        x = _layer_norm(x + attn, p["n1w"][l], p["n1b"][l])
        ff = jax.nn.relu(jnp.einsum('bsh,oh->bso', x, p["l1w"][l]) + p["l1b"][l])
        ff = jnp.einsum('bsf,of->bso', ff, p["l2w"][l]) + p["l2b"][l]
        x = _layer_norm(x + ff, p["n2w"][l], p["n2b"][l])
    cls_feat = x[:, 0, :]
    pi = cls_feat
    for i in range(ACTOR_LAYERS):
        pi = jax.nn.relu(pi @ p["pw"][i].T + p["pb"][i])
    vf = cls_feat
    for i in range(CRITIC_LAYERS):
        vf = jax.nn.relu(vf @ p["vw"][i].T + p["vb"][i])
    return pi, vf


# ---------------------------- param init ---------------------------------------
def create_positional_encoding(length, dim):
    pos = jnp.arange(length, dtype=jnp.float32)[:, None]
    i = jnp.arange(dim // 2, dtype=jnp.float32)[None, :]
    angle = pos / jnp.power(10000.0, (2.0 * i) / dim)
    pe = jnp.zeros((length, dim), jnp.float32)
    pe = pe.at[:, 0::2].set(jnp.sin(angle))
    pe = pe.at[:, 1::2].set(jnp.cos(angle))
    return pe


def init_params(key):
    ks = jax.random.split(key, 16)
    n = lambda k, shape, s=0.05: (s * jax.random.normal(k, shape)).astype(jnp.float32)
    return {
        "conv_w": n(ks[0], (HIDDEN, IN_FEATURE_DIM)),
        "conv_b": n(ks[1], (1, HIDDEN)),
        "cls":    n(ks[2], (1, HIDDEN), s=1.0),          # th.randn(cls_token_dim)
        "pos":    create_positional_encoding(S1, HIDDEN),
        # stacked transformer layer params (PyTorch layout: out_dim x in_dim)
        "ipw": n(ks[3], (N_LAYERS, 3 * HIDDEN, HIDDEN)),
        "ipb": n(ks[4], (N_LAYERS, 1, 3 * HIDDEN)),
        "opw": n(ks[5], (N_LAYERS, HIDDEN, HIDDEN)),
        "opb": n(ks[6], (N_LAYERS, 1, HIDDEN)),
        "l1w": n(ks[7], (N_LAYERS, FF_DIM, HIDDEN)),
        "l1b": n(ks[8], (N_LAYERS, 1, FF_DIM)),
        "l2w": n(ks[9], (N_LAYERS, HIDDEN, FF_DIM)),
        "l2b": n(ks[10], (N_LAYERS, 1, HIDDEN)),
        "n1w": jnp.ones((N_LAYERS, 1, HIDDEN), jnp.float32),
        "n1b": jnp.zeros((N_LAYERS, 1, HIDDEN), jnp.float32),
        "n2w": jnp.ones((N_LAYERS, 1, HIDDEN), jnp.float32),
        "n2b": jnp.zeros((N_LAYERS, 1, HIDDEN), jnp.float32),
        # actor / critic MLP heads
        "pw": n(ks[11], (ACTOR_LAYERS, ACTOR_DIM, ACTOR_DIM)),
        "pb": n(ks[12], (ACTOR_LAYERS, 1, ACTOR_DIM)),
        "vw": n(ks[13], (CRITIC_LAYERS, CRITIC_DIM, CRITIC_DIM)),
        "vb": n(ks[14], (CRITIC_LAYERS, 1, CRITIC_DIM)),
    }


if __name__ == "__main__":
    key = jax.random.PRNGKey(0)
    pkey, xkey = jax.random.split(key)
    params = init_params(pkey)

    # Small-batch case (B=2): adaptive tile -> b_tile=2, single grid step, no padding.
    features = jax.random.normal(xkey, (BATCH, FEATURE_DIM), dtype=jnp.float32)
    latent_pi, latent_vf = cls_transformer_forward(features, params)
    jax.block_until_ready((latent_pi, latent_vf))

    assert latent_pi.shape == (BATCH, ACTOR_DIM)
    assert latent_vf.shape == (BATCH, CRITIC_DIM)
    assert bool(jnp.all(jnp.isfinite(latent_pi))) and bool(jnp.all(jnp.isfinite(latent_vf)))

    ref_pi, ref_vf = reference_forward(features, params)
    assert bool(jnp.allclose(latent_pi, ref_pi, atol=2e-2, rtol=2e-2))
    assert bool(jnp.allclose(latent_vf, ref_vf, atol=2e-2, rtol=2e-2))

    # Batched case (B=20): b_tile=8 -> 3 "parallel" grid steps (exercises tiling/padding,
    # and on v7x shards the batch-tile axis across both TensorCores).
    feat_big = jax.random.normal(jax.random.PRNGKey(1), (20, FEATURE_DIM), dtype=jnp.float32)
    pi_b, vf_b = cls_transformer_forward(feat_big, params)
    jax.block_until_ready((pi_b, vf_b))
    ref_pi_b, ref_vf_b = reference_forward(feat_big, params)
    assert bool(jnp.allclose(pi_b, ref_pi_b, atol=2e-2, rtol=2e-2))
    assert bool(jnp.allclose(vf_b, ref_vf_b, atol=2e-2, rtol=2e-2))

    print("KERNEL_OK")
</pallas_src>

<mosaic_0001>
module attributes {stable_mosaic.version = 11 : i64} {
  func.func @cls_transformer_kernel(%arg0: i32, %arg1: memref<18x4xf32, #tpu.memory_space<vmem>>, %arg2: memref<4x32xbf16, #tpu.memory_space<vmem>>, %arg3: memref<18x32xf32, #tpu.memory_space<vmem>>, %arg4: memref<18x1xi32, #tpu.memory_space<vmem>>, %arg5: memref<1x18xi32, #tpu.memory_space<vmem>>, %arg6: memref<2x18xf32, #tpu.memory_space<vmem>>, %arg7: memref<2x32x96xbf16, #tpu.memory_space<vmem>>, %arg8: memref<2x1x96xf32, #tpu.memory_space<vmem>>, %arg9: memref<2x32x32xbf16, #tpu.memory_space<vmem>>, %arg10: memref<2x32x64xbf16, #tpu.memory_space<vmem>>, %arg11: memref<2x1x64xf32, #tpu.memory_space<vmem>>, %arg12: memref<2x64x32xbf16, #tpu.memory_space<vmem>>, %arg13: memref<2x6x32xf32, #tpu.memory_space<vmem>>, %arg14: memref<32x128xbf16, #tpu.memory_space<vmem>>, %arg15: memref<1x128x128xbf16, #tpu.memory_space<vmem>>, %arg16: memref<2x1x128xf32, #tpu.memory_space<vmem>>, %arg17: memref<2x128xf32, #tpu.memory_space<vmem>>) attributes {dimension_semantics = [#tpu.dimension_semantics<parallel>], iteration_bounds = array<i64: 1>, scalar_prefetch = 0 : i64, scratch_operands = 0 : i64, tpu.core_type = #tpu.core_type<tc>, window_params = [{transform_indices = @transform_0, window_bounds = array<i64: 18, 4>}, {pipeline_mode = #tpu.pipeline_mode<synchronous>, transform_indices = @transform_1, window_bounds = array<i64: 4, 32>}, {pipeline_mode = #tpu.pipeline_mode<synchronous>, transform_indices = @transform_2, window_bounds = array<i64: 18, 32>}, {pipeline_mode = #tpu.pipeline_mode<synchronous>, transform_indices = @transform_3, window_bounds = array<i64: 18, 1>}, {pipeline_mode = #tpu.pipeline_mode<synchronous>, transform_indices = @transform_4, window_bounds = array<i64: 1, 18>}, {pipeline_mode = #tpu.pipeline_mode<synchronous>, transform_indices = @transform_5, window_bounds = array<i64: 2, 18>}, {pipeline_mode = #tpu.pipeline_mode<synchronous>, transform_indices = @transform_6, window_bounds = array<i64: 2, 32, 96>}, {pipeline_mode = #tpu.pipeline_mode<synchronous>, transform_indices = @transform_7, window_bounds = array<i64: 2, 1, 96>}, {pipeline_mode = #tpu.pipeline_mode<synchronous>, transform_indices = @transform_8, window_bounds = array<i64: 2, 32, 32>}, {pipeline_mode = #tpu.pipeline_mode<synchronous>, transform_indices = @transform_9, window_bounds = array<i64: 2, 32, 64>}, {pipeline_mode = #tpu.pipeline_mode<synchronous>, transform_indices = @transform_10, window_bounds = array<i64: 2, 1, 64>}, {pipeline_mode = #tpu.pipeline_mode<synchronous>, transform_indices = @transform_11, window_bounds = array<i64: 2, 64, 32>}, {pipeline_mode = #tpu.pipeline_mode<synchronous>, transform_indices = @transform_12, window_bounds = array<i64: 2, 6, 32>}, {pipeline_mode = #tpu.pipeline_mode<synchronous>, transform_indices = @transform_13, window_bounds = array<i64: 32, 128>}, {pipeline_mode = #tpu.pipeline_mode<synchronous>, transform_indices = @transform_14, window_bounds = array<i64: 1, 128, 128>}, {pipeline_mode = #tpu.pipeline_mode<synchronous>, transform_indices = @transform_15, window_bounds = array<i64: 2, 1, 128>}, {transform_indices = @transform_16, window_bounds = array<i64: 2, 128>}]} {
    %c0 = arith.constant 0 : index
    %c0_0 = arith.constant 0 : index
    %0 = vector.load %arg4[%c0, %c0_0] : memref<18x1xi32, #tpu.memory_space<vmem>>, vector<18x1xi32>
    %c0_1 = arith.constant 0 : index
    %c0_2 = arith.constant 0 : index
    %1 = vector.load %arg5[%c0_1, %c0_2] : memref<1x18xi32, #tpu.memory_space<vmem>>, vector<1x18xi32>
    %2 = vector.broadcast %0 : vector<18x1xi32> to vector<18x18xi32>
    %3 = vector.broadcast %1 : vector<1x18xi32> to vector<18x18xi32>
    %4 = arith.cmpi eq, %2, %3 : vector<18x18xi32>
    %5 = tpu.iota {dimensions = array<i32: 1>} : vector<1x32xi32>
    %c0_i32 = arith.constant 0 : i32
    %6 = vector.broadcast %c0_i32 : i32 to vector<1x32xi32>
    %7 = arith.cmpi sge, %5, %6 : vector<1x32xi32>
    %c8_i32 = arith.constant 8 : i32
    %8 = vector.broadcast %c8_i32 : i32 to vector<1x32xi32>
    %9 = arith.cmpi slt, %5, %8 : vector<1x32xi32>
    %10 = arith.andi %7, %9 : vector<1x32xi1>
    %11 = arith.extui %10 : vector<1x32xi1> to vector<1x32xi32>
    %12 = arith.sitofp %11 : vector<1x32xi32> to vector<1x32xf32>
    %c8_i32_3 = arith.constant 8 : i32
    %13 = vector.broadcast %c8_i32_3 : i32 to vector<1x32xi32>
    %14 = arith.cmpi sge, %5, %13 : vector<1x32xi32>
    %c16_i32 = arith.constant 16 : i32
    %15 = vector.broadcast %c16_i32 : i32 to vector<1x32xi32>
    %16 = arith.cmpi slt, %5, %15 : vector<1x32xi32>
    %17 = arith.andi %14, %16 : vector<1x32xi1>
    %18 = arith.extui %17 : vector<1x32xi1> to vector<1x32xi32>
    %19 = arith.sitofp %18 : vector<1x32xi32> to vector<1x32xf32>
    %c16_i32_4 = arith.constant 16 : i32
    %20 = vector.broadcast %c16_i32_4 : i32 to vector<1x32xi32>
    %21 = arith.cmpi sge, %5, %20 : vector<1x32xi32>
    %c24_i32 = arith.constant 24 : i32
    %22 = vector.broadcast %c24_i32 : i32 to vector<1x32xi32>
    %23 = arith.cmpi slt, %5, %22 : vector<1x32xi32>
    %24 = arith.andi %21, %23 : vector<1x32xi1>
    %25 = arith.extui %24 : vector<1x32xi1> to vector<1x32xi32>
    %26 = arith.sitofp %25 : vector<1x32xi32> to vector<1x32xf32>
    %c24_i32_5 = arith.constant 24 : i32
    %27 = vector.broadcast %c24_i32_5 : i32 to vector<1x32xi32>
    %28 = arith.cmpi sge, %5, %27 : vector<1x32xi32>
    %c32_i32 = arith.constant 32 : i32
    %29 = vector.broadcast %c32_i32 : i32 to vector<1x32xi32>
    %30 = arith.cmpi slt, %5, %29 : vector<1x32xi32>
    %31 = arith.andi %28, %30 : vector<1x32xi1>
    %32 = arith.extui %31 : vector<1x32xi1> to vector<1x32xi32>
    %33 = arith.sitofp %32 : vector<1x32xi32> to vector<1x32xf32>
    %c0_6 = arith.constant 0 : index
    %c0_7 = arith.constant 0 : index
    %34 = vector.load %arg1[%c0_6, %c0_7] : memref<18x4xf32, #tpu.memory_space<vmem>>, vector<18x4xf32>
    %35 = arith.truncf %34 : vector<18x4xf32> to vector<18x4xbf16>
    %c0_8 = arith.constant 0 : index
    %c0_9 = arith.constant 0 : index
    %36 = vector.load %arg2[%c0_8, %c0_9] : memref<4x32xbf16, #tpu.memory_space<vmem>>, vector<4x32xbf16>
    %cst = arith.constant dense<0.000000e+00> : vector<18x32xf32>
    %37 = tpu.matmul %35, %36, %cst {dimension_numbers = #tpu.dot_dimension_numbers<[1], [0], [0], [1], [0, 0, 1, 1], [], []>} : vector<18x4xbf16>, vector<4x32xbf16>, vector<18x32xf32> -> vector<18x32xf32>
    %c0_10 = arith.constant 0 : index
    %c0_11 = arith.constant 0 : index
    %38 = vector.load %arg3[%c0_10, %c0_11] : memref<18x32xf32, #tpu.memory_space<vmem>>, vector<18x32xf32>
    %39 = arith.addf %37, %38 : vector<18x32xf32>
    %c0_12 = arith.constant 0 : index
    %c0_13 = arith.constant 0 : index
    %c0_14 = arith.constant 0 : index
    %40 = vector.load %arg13[%c0_12, %c0_13, %c0_14] : memref<2x6x32xf32, #tpu.memory_space<vmem>>, vector<1x6x32xf32>
    %41 = vector.shape_cast %40 : vector<1x6x32xf32> to vector<6x32xf32>
    %42 = arith.truncf %39 : vector<18x32xf32> to vector<18x32xbf16>
    %c0_15 = arith.constant 0 : index
    %c0_16 = arith.constant 0 : index
    %c0_17 = arith.constant 0 : index
    %43 = vector.load %arg7[%c0_15, %c0_16, %c0_17] : memref<2x32x96xbf16, #tpu.memory_space<vmem>>, vector<1x32x96xbf16>
    %44 = vector.shape_cast %43 : vector<1x32x96xbf16> to vector<32x96xbf16>
    %cst_18 = arith.constant dense<0.000000e+00> : vector<18x96xf32>
    %45 = tpu.matmul %42, %44, %cst_18 {dimension_numbers = #tpu.dot_dimension_numbers<[1], [0], [0], [1], [0, 0, 1, 1], [], []>} : vector<18x32xbf16>, vector<32x96xbf16>, vector<18x96xf32> -> vector<18x96xf32>
    %c0_19 = arith.constant 0 : index
    %c0_20 = arith.constant 0 : index
    %c0_21 = arith.constant 0 : index
    %46 = vector.load %arg8[%c0_19, %c0_20, %c0_21] : memref<2x1x96xf32, #tpu.memory_space<vmem>>, vector<1x1x96xf32>
    %47 = vector.shape_cast %46 : vector<1x1x96xf32> to vector<1x96xf32>
    %48 = vector.broadcast %47 : vector<1x96xf32> to vector<18x96xf32>
    %49 = arith.addf %45, %48 : vector<18x96xf32>
    %50 = vector.extract_strided_slice %49 {offsets = [0, 0], sizes = [18, 32], strides = [1, 1]} : vector<18x96xf32> to vector<18x32xf32>
    %51 = vector.extract_strided_slice %49 {offsets = [0, 32], sizes = [18, 32], strides = [1, 1]} : vector<18x96xf32> to vector<18x32xf32>
    %52 = vector.extract_strided_slice %49 {offsets = [0, 64], sizes = [18, 32], strides = [1, 1]} : vector<18x96xf32> to vector<18x32xf32>
    %53 = arith.truncf %51 : vector<18x32xf32> to vector<18x32xbf16>
    %cst_22 = arith.constant 0.000000e+00 : f32
    %54 = vector.broadcast %cst_22 : f32 to vector<18x32xf32>
    %55 = vector.broadcast %12 : vector<1x32xf32> to vector<18x32xf32>
    %56 = arith.mulf %50, %55 : vector<18x32xf32>
    %57 = arith.truncf %56 : vector<18x32xf32> to vector<18x32xbf16>
    %cst_23 = arith.constant dense<0.000000e+00> : vector<18x18xf32>
    %58 = tpu.matmul %57, %53, %cst_23 {dimension_numbers = #tpu.dot_dimension_numbers<[1], [1], [0], [0], [0, 0, 1, 0], [], []>} : vector<18x32xbf16>, vector<18x32xbf16>, vector<18x18xf32> -> vector<18x18xf32>
    %cst_24 = arith.constant -1.000000e+09 : f32
    %59 = vector.broadcast %cst_24 : f32 to vector<18x18xf32>
    %60 = arith.select %4, %58, %59 : vector<18x18xi1>, vector<18x18xf32>
    %cst_25 = arith.constant dense<0xFF800000> : vector<18xf32>
    %61 = vector.multi_reduction <maximumf>, %60, %cst_25 [1] : vector<18x18xf32> to vector<18xf32>
    %62 = vector.shape_cast %61 : vector<18xf32> to vector<18x1xf32>
    %63 = vector.broadcast %62 : vector<18x1xf32> to vector<18x18xf32>
    %64 = arith.subf %60, %63 : vector<18x18xf32>
    %65 = math.exp %64 : vector<18x18xf32>
    %cst_26 = arith.constant dense<0.000000e+00> : vector<18xf32>
    %66 = vector.multi_reduction <add>, %65, %cst_26 [1] : vector<18x18xf32> to vector<18xf32>
    %67 = vector.shape_cast %66 : vector<18xf32> to vector<18x1xf32>
    %68 = tpu.reciprocal %67 {approx = true} : vector<18x1xf32> -> vector<18x1xf32>
    %69 = vector.broadcast %68 : vector<18x1xf32> to vector<18x18xf32>
    %70 = arith.mulf %65, %69 : vector<18x18xf32>
    %71 = arith.truncf %70 : vector<18x18xf32> to vector<18x18xbf16>
    %72 = vector.broadcast %12 : vector<1x32xf32> to vector<18x32xf32>
    %73 = arith.mulf %52, %72 : vector<18x32xf32>
    %74 = arith.truncf %73 : vector<18x32xf32> to vector<18x32xbf16>
    %cst_27 = arith.constant dense<0.000000e+00> : vector<18x32xf32>
    %75 = tpu.matmul %71, %74, %cst_27 {dimension_numbers = #tpu.dot_dimension_numbers<[1], [0], [0], [1], [0, 0, 1, 1], [], []>} : vector<18x18xbf16>, vector<18x32xbf16>, vector<18x32xf32> -> vector<18x32xf32>
    %76 = arith.addf %54, %75 : vector<18x32xf32>
    %77 = vector.broadcast %19 : vector<1x32xf32> to vector<18x32xf32>
    %78 = arith.mulf %50, %77 : vector<18x32xf32>
    %79 = arith.truncf %78 : vector<18x32xf32> to vector<18x32xbf16>
    %cst_28 = arith.constant dense<0.000000e+00> : vector<18x18xf32>
    %80 = tpu.matmul %79, %53, %cst_28 {dimension_numbers = #tpu.dot_dimension_numbers<[1], [1], [0], [0], [0, 0, 1, 0], [], []>} : vector<18x32xbf16>, vector<18x32xbf16>, vector<18x18xf32> -> vector<18x18xf32>
    %cst_29 = arith.constant -1.000000e+09 : f32
    %81 = vector.broadcast %cst_29 : f32 to vector<18x18xf32>
    %82 = arith.select %4, %80, %81 : vector<18x18xi1>, vector<18x18xf32>
    %cst_30 = arith.constant dense<0xFF800000> : vector<18xf32>
    %83 = vector.multi_reduction <maximumf>, %82, %cst_30 [1] : vector<18x18xf32> to vector<18xf32>
    %84 = vector.shape_cast %83 : vector<18xf32> to vector<18x1xf32>
    %85 = vector.broadcast %84 : vector<18x1xf32> to vector<18x18xf32>
    %86 = arith.subf %82, %85 : vector<18x18xf32>
    %87 = math.exp %86 : vector<18x18xf32>
    %cst_31 = arith.constant dense<0.000000e+00> : vector<18xf32>
    %88 = vector.multi_reduction <add>, %87, %cst_31 [1] : vector<18x18xf32> to vector<18xf32>
    %89 = vector.shape_cast %88 : vector<18xf32> to vector<18x1xf32>
    %90 = tpu.reciprocal %89 {approx = true} : vector<18x1xf32> -> vector<18x1xf32>
    %91 = vector.broadcast %90 : vector<18x1xf32> to vector<18x18xf32>
    %92 = arith.mulf %87, %91 : vector<18x18xf32>
    %93 = arith.truncf %92 : vector<18x18xf32> to vector<18x18xbf16>
    %94 = vector.broadcast %19 : vector<1x32xf32> to vector<18x32xf32>
    %95 = arith.mulf %52, %94 : vector<18x32xf32>
    %96 = arith.truncf %95 : vector<18x32xf32> to vector<18x32xbf16>
    %cst_32 = arith.constant dense<0.000000e+00> : vector<18x32xf32>
    %97 = tpu.matmul %93, %96, %cst_32 {dimension_numbers = #tpu.dot_dimension_numbers<[1], [0], [0], [1], [0, 0, 1, 1], [], []>} : vector<18x18xbf16>, vector<18x32xbf16>, vector<18x32xf32> -> vector<18x32xf32>
    %98 = arith.addf %76, %97 : vector<18x32xf32>
    %99 = vector.broadcast %26 : vector<1x32xf32> to vector<18x32xf32>
    %100 = arith.mulf %50, %99 : vector<18x32xf32>
    %101 = arith.truncf %100 : vector<18x32xf32> to vector<18x32xbf16>
    %cst_33 = arith.constant dense<0.000000e+00> : vector<18x18xf32>
    %102 = tpu.matmul %101, %53, %cst_33 {dimension_numbers = #tpu.dot_dimension_numbers<[1], [1], [0], [0], [0, 0, 1, 0], [], []>} : vector<18x32xbf16>, vector<18x32xbf16>, vector<18x18xf32> -> vector<18x18xf32>
    %cst_34 = arith.constant -1.000000e+09 : f32
    %103 = vector.broadcast %cst_34 : f32 to vector<18x18xf32>
    %104 = arith.select %4, %102, %103 : vector<18x18xi1>, vector<18x18xf32>
    %cst_35 = arith.constant dense<0xFF800000> : vector<18xf32>
    %105 = vector.multi_reduction <maximumf>, %104, %cst_35 [1] : vector<18x18xf32> to vector<18xf32>
    %106 = vector.shape_cast %105 : vector<18xf32> to vector<18x1xf32>
    %107 = vector.broadcast %106 : vector<18x1xf32> to vector<18x18xf32>
    %108 = arith.subf %104, %107 : vector<18x18xf32>
    %109 = math.exp %108 : vector<18x18xf32>
    %cst_36 = arith.constant dense<0.000000e+00> : vector<18xf32>
    %110 = vector.multi_reduction <add>, %109, %cst_36 [1] : vector<18x18xf32> to vector<18xf32>
    %111 = vector.shape_cast %110 : vector<18xf32> to vector<18x1xf32>
    %112 = tpu.reciprocal %111 {approx = true} : vector<18x1xf32> -> vector<18x1xf32>
    %113 = vector.broadcast %112 : vector<18x1xf32> to vector<18x18xf32>
    %114 = arith.mulf %109, %113 : vector<18x18xf32>
    %115 = arith.truncf %114 : vector<18x18xf32> to vector<18x18xbf16>
    %116 = vector.broadcast %26 : vector<1x32xf32> to vector<18x32xf32>
    %117 = arith.mulf %52, %116 : vector<18x32xf32>
    %118 = arith.truncf %117 : vector<18x32xf32> to vector<18x32xbf16>
    %cst_37 = arith.constant dense<0.000000e+00> : vector<18x32xf32>
    %119 = tpu.matmul %115, %118, %cst_37 {dimension_numbers = #tpu.dot_dimension_numbers<[1], [0], [0], [1], [0, 0, 1, 1], [], []>} : vector<18x18xbf16>, vector<18x32xbf16>, vector<18x32xf32> -> vector<18x32xf32>
    %120 = arith.addf %98, %119 : vector<18x32xf32>
    %121 = vector.broadcast %33 : vector<1x32xf32> to vector<18x32xf32>
    %122 = arith.mulf %50, %121 : vector<18x32xf32>
    %123 = arith.truncf %122 : vector<18x32xf32> to vector<18x32xbf16>
    %cst_38 = arith.constant dense<0.000000e+00> : vector<18x18xf32>
    %124 = tpu.matmul %123, %53, %cst_38 {dimension_numbers = #tpu.dot_dimension_numbers<[1], [1], [0], [0], [0, 0, 1, 0], [], []>} : vector<18x32xbf16>, vector<18x32xbf16>, vector<18x18xf32> -> vector<18x18xf32>
    %cst_39 = arith.constant -1.000000e+09 : f32
    %125 = vector.broadcast %cst_39 : f32 to vector<18x18xf32>
    %126 = arith.select %4, %124, %125 : vector<18x18xi1>, vector<18x18xf32>
    %cst_40 = arith.constant dense<0xFF800000> : vector<18xf32>
    %127 = vector.multi_reduction <maximumf>, %126, %cst_40 [1] : vector<18x18xf32> to vector<18xf32>
    %128 = vector.shape_cast %127 : vector<18xf32> to vector<18x1xf32>
    %129 = vector.broadcast %128 : vector<18x1xf32> to vector<18x18xf32>
    %130 = arith.subf %126, %129 : vector<18x18xf32>
    %131 = math.exp %130 : vector<18x18xf32>
    %cst_41 = arith.constant dense<0.000000e+00> : vector<18xf32>
    %132 = vector.multi_reduction <add>, %131, %cst_41 [1] : vector<18x18xf32> to vector<18xf32>
    %133 = vector.shape_cast %132 : vector<18xf32> to vector<18x1xf32>
    %134 = tpu.reciprocal %133 {approx = true} : vector<18x1xf32> -> vector<18x1xf32>
    %135 = vector.broadcast %134 : vector<18x1xf32> to vector<18x18xf32>
    %136 = arith.mulf %131, %135 : vector<18x18xf32>
    %137 = arith.truncf %136 : vector<18x18xf32> to vector<18x18xbf16>
    %138 = vector.broadcast %33 : vector<1x32xf32> to vector<18x32xf32>
    %139 = arith.mulf %52, %138 : vector<18x32xf32>
    %140 = arith.truncf %139 : vector<18x32xf32> to vector<18x32xbf16>
    %cst_42 = arith.constant dense<0.000000e+00> : vector<18x32xf32>
    %141 = tpu.matmul %137, %140, %cst_42 {dimension_numbers = #tpu.dot_dimension_numbers<[1], [0], [0], [1], [0, 0, 1, 1], [], []>} : vector<18x18xbf16>, vector<18x32xbf16>, vector<18x32xf32> -> vector<18x32xf32>
    %142 = arith.addf %120, %141 : vector<18x32xf32>
    %143 = arith.truncf %142 : vector<18x32xf32> to vector<18x32xbf16>
    %c0_43 = arith.constant 0 : index
    %c0_44 = arith.constant 0 : index
    %c0_45 = arith.constant 0 : index
    %144 = vector.load %arg9[%c0_43, %c0_44, %c0_45] : memref<2x32x32xbf16, #tpu.memory_space<vmem>>, vector<1x32x32xbf16>
    %145 = vector.shape_cast %144 : vector<1x32x32xbf16> to vector<32x32xbf16>
    %cst_46 = arith.constant dense<0.000000e+00> : vector<18x32xf32>
    %146 = tpu.matmul %143, %145, %cst_46 {dimension_numbers = #tpu.dot_dimension_numbers<[1], [0], [0], [1], [0, 0, 1, 1], [], []>} : vector<18x32xbf16>, vector<32x32xbf16>, vector<18x32xf32> -> vector<18x32xf32>
    %147 = vector.extract_strided_slice %41 {offsets = [0, 0], sizes = [1, 32], strides = [1, 1]} : vector<6x32xf32> to vector<1x32xf32>
    %148 = vector.broadcast %147 : vector<1x32xf32> to vector<18x32xf32>
    %149 = arith.addf %146, %148 : vector<18x32xf32>
    %150 = arith.addf %39, %149 : vector<18x32xf32>
    %151 = vector.extract_strided_slice %41 {offsets = [2, 0], sizes = [1, 32], strides = [1, 1]} : vector<6x32xf32> to vector<1x32xf32>
    %152 = vector.extract_strided_slice %41 {offsets = [3, 0], sizes = [1, 32], strides = [1, 1]} : vector<6x32xf32> to vector<1x32xf32>
    %cst_47 = arith.constant dense<0.000000e+00> : vector<18xf32>
    %153 = vector.multi_reduction <add>, %150, %cst_47 [1] : vector<18x32xf32> to vector<18xf32>
    %154 = vector.shape_cast %153 : vector<18xf32> to vector<18x1xf32>
    %cst_48 = arith.constant 3.200000e+01 : f32
    %155 = vector.broadcast %cst_48 : f32 to vector<18x1xf32>
    %156 = arith.divf %154, %155 : vector<18x1xf32>
    %157 = vector.broadcast %156 : vector<18x1xf32> to vector<18x32xf32>
    %158 = arith.subf %150, %157 : vector<18x32xf32>
    %159 = arith.mulf %158, %158 : vector<18x32xf32>
    %cst_49 = arith.constant dense<0.000000e+00> : vector<18xf32>
    %160 = vector.multi_reduction <add>, %159, %cst_49 [1] : vector<18x32xf32> to vector<18xf32>
    %161 = vector.shape_cast %160 : vector<18xf32> to vector<18x1xf32>
    %cst_50 = arith.constant 3.200000e+01 : f32
    %162 = vector.broadcast %cst_50 : f32 to vector<18x1xf32>
    %163 = arith.divf %161, %162 : vector<18x1xf32>
    %164 = vector.broadcast %156 : vector<18x1xf32> to vector<18x32xf32>
    %165 = arith.subf %150, %164 : vector<18x32xf32>
    %cst_51 = arith.constant 9.99999974E-6 : f32
    %166 = vector.broadcast %cst_51 : f32 to vector<18x1xf32>
    %167 = arith.addf %163, %166 : vector<18x1xf32>
    %168 = math.rsqrt %167 : vector<18x1xf32>
    %169 = vector.broadcast %168 : vector<18x1xf32> to vector<18x32xf32>
    %170 = arith.mulf %165, %169 : vector<18x32xf32>
    %171 = vector.broadcast %151 : vector<1x32xf32> to vector<18x32xf32>
    %172 = arith.mulf %170, %171 : vector<18x32xf32>
    %173 = vector.broadcast %152 : vector<1x32xf32> to vector<18x32xf32>
    %174 = arith.addf %172, %173 : vector<18x32xf32>
    %175 = arith.truncf %174 : vector<18x32xf32> to vector<18x32xbf16>
    %c0_52 = arith.constant 0 : index
    %c0_53 = arith.constant 0 : index
    %c0_54 = arith.constant 0 : index
    %176 = vector.load %arg10[%c0_52, %c0_53, %c0_54] : memref<2x32x64xbf16, #tpu.memory_space<vmem>>, vector<1x32x64xbf16>
    %177 = vector.shape_cast %176 : vector<1x32x64xbf16> to vector<32x64xbf16>
    %cst_55 = arith.constant dense<0.000000e+00> : vector<18x64xf32>
    %178 = tpu.matmul %175, %177, %cst_55 {dimension_numbers = #tpu.dot_dimension_numbers<[1], [0], [0], [1], [0, 0, 1, 1], [], []>} : vector<18x32xbf16>, vector<32x64xbf16>, vector<18x64xf32> -> vector<18x64xf32>
    %c0_56 = arith.constant 0 : index
    %c0_57 = arith.constant 0 : index
    %c0_58 = arith.constant 0 : index
    %179 = vector.load %arg11[%c0_56, %c0_57, %c0_58] : memref<2x1x64xf32, #tpu.memory_space<vmem>>, vector<1x1x64xf32>
    %180 = vector.shape_cast %179 : vector<1x1x64xf32> to vector<1x64xf32>
    %181 = vector.broadcast %180 : vector<1x64xf32> to vector<18x64xf32>
    %182 = arith.addf %178, %181 : vector<18x64xf32>
    %cst_59 = arith.constant 0.000000e+00 : f32
    %183 = vector.broadcast %cst_59 : f32 to vector<18x64xf32>
    %184 = arith.maximumf %182, %183 : vector<18x64xf32>
    %185 = arith.truncf %184 : vector<18x64xf32> to vector<18x64xbf16>
    %c0_60 = arith.constant 0 : index
    %c0_61 = arith.constant 0 : index
    %c0_62 = arith.constant 0 : index
    %186 = vector.load %arg12[%c0_60, %c0_61, %c0_62] : memref<2x64x32xbf16, #tpu.memory_space<vmem>>, vector<1x64x32xbf16>
    %187 = vector.shape_cast %186 : vector<1x64x32xbf16> to vector<64x32xbf16>
    %cst_63 = arith.constant dense<0.000000e+00> : vector<18x32xf32>
    %188 = tpu.matmul %185, %187, %cst_63 {dimension_numbers = #tpu.dot_dimension_numbers<[1], [0], [0], [1], [0, 0, 1, 1], [], []>} : vector<18x64xbf16>, vector<64x32xbf16>, vector<18x32xf32> -> vector<18x32xf32>
    %189 = vector.extract_strided_slice %41 {offsets = [1, 0], sizes = [1, 32], strides = [1, 1]} : vector<6x32xf32> to vector<1x32xf32>
    %190 = vector.broadcast %189 : vector<1x32xf32> to vector<18x32xf32>
    %191 = arith.addf %188, %190 : vector<18x32xf32>
    %192 = arith.addf %174, %191 : vector<18x32xf32>
    %193 = vector.extract_strided_slice %41 {offsets = [4, 0], sizes = [1, 32], strides = [1, 1]} : vector<6x32xf32> to vector<1x32xf32>
    %194 = vector.extract_strided_slice %41 {offsets = [5, 0], sizes = [1, 32], strides = [1, 1]} : vector<6x32xf32> to vector<1x32xf32>
    %cst_64 = arith.constant dense<0.000000e+00> : vector<18xf32>
    %195 = vector.multi_reduction <add>, %192, %cst_64 [1] : vector<18x32xf32> to vector<18xf32>
    %196 = vector.shape_cast %195 : vector<18xf32> to vector<18x1xf32>
    %cst_65 = arith.constant 3.200000e+01 : f32
    %197 = vector.broadcast %cst_65 : f32 to vector<18x1xf32>
    %198 = arith.divf %196, %197 : vector<18x1xf32>
    %199 = vector.broadcast %198 : vector<18x1xf32> to vector<18x32xf32>
    %200 = arith.subf %192, %199 : vector<18x32xf32>
    %201 = arith.mulf %200, %200 : vector<18x32xf32>
    %cst_66 = arith.constant dense<0.000000e+00> : vector<18xf32>
    %202 = vector.multi_reduction <add>, %201, %cst_66 [1] : vector<18x32xf32> to vector<18xf32>
    %203 = vector.shape_cast %202 : vector<18xf32> to vector<18x1xf32>
    %cst_67 = arith.constant 3.200000e+01 : f32
    %204 = vector.broadcast %cst_67 : f32 to vector<18x1xf32>
    %205 = arith.divf %203, %204 : vector<18x1xf32>
    %206 = vector.broadcast %198 : vector<18x1xf32> to vector<18x32xf32>
    %207 = arith.subf %192, %206 : vector<18x32xf32>
    %cst_68 = arith.constant 9.99999974E-6 : f32
    %208 = vector.broadcast %cst_68 : f32 to vector<18x1xf32>
    %209 = arith.addf %205, %208 : vector<18x1xf32>
    %210 = math.rsqrt %209 : vector<18x1xf32>
    %211 = vector.broadcast %210 : vector<18x1xf32> to vector<18x32xf32>
    %212 = arith.mulf %207, %211 : vector<18x32xf32>
    %213 = vector.broadcast %193 : vector<1x32xf32> to vector<18x32xf32>
    %214 = arith.mulf %212, %213 : vector<18x32xf32>
    %215 = vector.broadcast %194 : vector<1x32xf32> to vector<18x32xf32>
    %216 = arith.addf %214, %215 : vector<18x32xf32>
    %c1 = arith.constant 1 : index
    %c0_69 = arith.constant 0 : index
    %c0_70 = arith.constant 0 : index
    %217 = vector.load %arg13[%c1, %c0_69, %c0_70] : memref<2x6x32xf32, #tpu.memory_space<vmem>>, vector<1x6x32xf32>
    %218 = vector.shape_cast %217 : vector<1x6x32xf32> to vector<6x32xf32>
    %219 = arith.truncf %216 : vector<18x32xf32> to vector<18x32xbf16>
    %c1_71 = arith.constant 1 : index
    %c0_72 = arith.constant 0 : index
    %c0_73 = arith.constant 0 : index
    %220 = vector.load %arg7[%c1_71, %c0_72, %c0_73] : memref<2x32x96xbf16, #tpu.memory_space<vmem>>, vector<1x32x96xbf16>
    %221 = vector.shape_cast %220 : vector<1x32x96xbf16> to vector<32x96xbf16>
    %cst_74 = arith.constant dense<0.000000e+00> : vector<18x96xf32>
    %222 = tpu.matmul %219, %221, %cst_74 {dimension_numbers = #tpu.dot_dimension_numbers<[1], [0], [0], [1], [0, 0, 1, 1], [], []>} : vector<18x32xbf16>, vector<32x96xbf16>, vector<18x96xf32> -> vector<18x96xf32>
    %c1_75 = arith.constant 1 : index
    %c0_76 = arith.constant 0 : index
    %c0_77 = arith.constant 0 : index
    %223 = vector.load %arg8[%c1_75, %c0_76, %c0_77] : memref<2x1x96xf32, #tpu.memory_space<vmem>>, vector<1x1x96xf32>
    %224 = vector.shape_cast %223 : vector<1x1x96xf32> to vector<1x96xf32>
    %225 = vector.broadcast %224 : vector<1x96xf32> to vector<18x96xf32>
    %226 = arith.addf %222, %225 : vector<18x96xf32>
    %227 = vector.extract_strided_slice %226 {offsets = [0, 0], sizes = [18, 32], strides = [1, 1]} : vector<18x96xf32> to vector<18x32xf32>
    %228 = vector.extract_strided_slice %226 {offsets = [0, 32], sizes = [18, 32], strides = [1, 1]} : vector<18x96xf32> to vector<18x32xf32>
    %229 = vector.extract_strided_slice %226 {offsets = [0, 64], sizes = [18, 32], strides = [1, 1]} : vector<18x96xf32> to vector<18x32xf32>
    %230 = arith.truncf %228 : vector<18x32xf32> to vector<18x32xbf16>
    %cst_78 = arith.constant 0.000000e+00 : f32
    %231 = vector.broadcast %cst_78 : f32 to vector<18x32xf32>
    %232 = vector.broadcast %12 : vector<1x32xf32> to vector<18x32xf32>
    %233 = arith.mulf %227, %232 : vector<18x32xf32>
    %234 = arith.truncf %233 : vector<18x32xf32> to vector<18x32xbf16>
    %cst_79 = arith.constant dense<0.000000e+00> : vector<18x18xf32>
    %235 = tpu.matmul %234, %230, %cst_79 {dimension_numbers = #tpu.dot_dimension_numbers<[1], [1], [0], [0], [0, 0, 1, 0], [], []>} : vector<18x32xbf16>, vector<18x32xbf16>, vector<18x18xf32> -> vector<18x18xf32>
    %cst_80 = arith.constant -1.000000e+09 : f32
    %236 = vector.broadcast %cst_80 : f32 to vector<18x18xf32>
    %237 = arith.select %4, %235, %236 : vector<18x18xi1>, vector<18x18xf32>
    %cst_81 = arith.constant dense<0xFF800000> : vector<18xf32>
    %238 = vector.multi_reduction <maximumf>, %237, %cst_81 [1] : vector<18x18xf32> to vector<18xf32>
    %239 = vector.shape_cast %238 : vector<18xf32> to vector<18x1xf32>
    %240 = vector.broadcast %239 : vector<18x1xf32> to vector<18x18xf32>
    %241 = arith.subf %237, %240 : vector<18x18xf32>
    %242 = math.exp %241 : vector<18x18xf32>
    %cst_82 = arith.constant dense<0.000000e+00> : vector<18xf32>
    %243 = vector.multi_reduction <add>, %242, %cst_82 [1] : vector<18x18xf32> to vector<18xf32>
    %244 = vector.shape_cast %243 : vector<18xf32> to vector<18x1xf32>
    %245 = tpu.reciprocal %244 {approx = true} : vector<18x1xf32> -> vector<18x1xf32>
    %246 = vector.broadcast %245 : vector<18x1xf32> to vector<18x18xf32>
    %247 = arith.mulf %242, %246 : vector<18x18xf32>
    %248 = arith.truncf %247 : vector<18x18xf32> to vector<18x18xbf16>
    %249 = vector.broadcast %12 : vector<1x32xf32> to vector<18x32xf32>
    %250 = arith.mulf %229, %249 : vector<18x32xf32>
    %251 = arith.truncf %250 : vector<18x32xf32> to vector<18x32xbf16>
    %cst_83 = arith.constant dense<0.000000e+00> : vector<18x32xf32>
    %252 = tpu.matmul %248, %251, %cst_83 {dimension_numbers = #tpu.dot_dimension_numbers<[1], [0], [0], [1], [0, 0, 1, 1], [], []>} : vector<18x18xbf16>, vector<18x32xbf16>, vector<18x32xf32> -> vector<18x32xf32>
    %253 = arith.addf %231, %252 : vector<18x32xf32>
    %254 = vector.broadcast %19 : vector<1x32xf32> to vector<18x32xf32>
    %255 = arith.mulf %227, %254 : vector<18x32xf32>
    %256 = arith.truncf %255 : vector<18x32xf32> to vector<18x32xbf16>
    %cst_84 = arith.constant dense<0.000000e+00> : vector<18x18xf32>
    %257 = tpu.matmul %256, %230, %cst_84 {dimension_numbers = #tpu.dot_dimension_numbers<[1], [1], [0], [0], [0, 0, 1, 0], [], []>} : vector<18x32xbf16>, vector<18x32xbf16>, vector<18x18xf32> -> vector<18x18xf32>
    %cst_85 = arith.constant -1.000000e+09 : f32
    %258 = vector.broadcast %cst_85 : f32 to vector<18x18xf32>
    %259 = arith.select %4, %257, %258 : vector<18x18xi1>, vector<18x18xf32>
    %cst_86 = arith.constant dense<0xFF800000> : vector<18xf32>
    %260 = vector.multi_reduction <maximumf>, %259, %cst_86 [1] : vector<18x18xf32> to vector<18xf32>
    %261 = vector.shape_cast %260 : vector<18xf32> to vector<18x1xf32>
    %262 = vector.broadcast %261 : vector<18x1xf32> to vector<18x18xf32>
    %263 = arith.subf %259, %262 : vector<18x18xf32>
    %264 = math.exp %263 : vector<18x18xf32>
    %cst_87 = arith.constant dense<0.000000e+00> : vector<18xf32>
    %265 = vector.multi_reduction <add>, %264, %cst_87 [1] : vector<18x18xf32> to vector<18xf32>
    %266 = vector.shape_cast %265 : vector<18xf32> to vector<18x1xf32>
    %267 = tpu.reciprocal %266 {approx = true} : vector<18x1xf32> -> vector<18x1xf32>
    %268 = vector.broadcast %267 : vector<18x1xf32> to vector<18x18xf32>
    %269 = arith.mulf %264, %268 : vector<18x18xf32>
    %270 = arith.truncf %269 : vector<18x18xf32> to vector<18x18xbf16>
    %271 = vector.broadcast %19 : vector<1x32xf32> to vector<18x32xf32>
    %272 = arith.mulf %229, %271 : vector<18x32xf32>
    %273 = arith.truncf %272 : vector<18x32xf32> to vector<18x32xbf16>
    %cst_88 = arith.constant dense<0.000000e+00> : vector<18x32xf32>
    %274 = tpu.matmul %270, %273, %cst_88 {dimension_numbers = #tpu.dot_dimension_numbers<[1], [0], [0], [1], [0, 0, 1, 1], [], []>} : vector<18x18xbf16>, vector<18x32xbf16>, vector<18x32xf32> -> vector<18x32xf32>
    %275 = arith.addf %253, %274 : vector<18x32xf32>
    %276 = vector.broadcast %26 : vector<1x32xf32> to vector<18x32xf32>
    %277 = arith.mulf %227, %276 : vector<18x32xf32>
    %278 = arith.truncf %277 : vector<18x32xf32> to vector<18x32xbf16>
    %cst_89 = arith.constant dense<0.000000e+00> : vector<18x18xf32>
    %279 = tpu.matmul %278, %230, %cst_89 {dimension_numbers = #tpu.dot_dimension_numbers<[1], [1], [0], [0], [0, 0, 1, 0], [], []>} : vector<18x32xbf16>, vector<18x32xbf16>, vector<18x18xf32> -> vector<18x18xf32>
    %cst_90 = arith.constant -1.000000e+09 : f32
    %280 = vector.broadcast %cst_90 : f32 to vector<18x18xf32>
    %281 = arith.select %4, %279, %280 : vector<18x18xi1>, vector<18x18xf32>
    %cst_91 = arith.constant dense<0xFF800000> : vector<18xf32>
    %282 = vector.multi_reduction <maximumf>, %281, %cst_91 [1] : vector<18x18xf32> to vector<18xf32>
    %283 = vector.shape_cast %282 : vector<18xf32> to vector<18x1xf32>
    %284 = vector.broadcast %283 : vector<18x1xf32> to vector<18x18xf32>
    %285 = arith.subf %281, %284 : vector<18x18xf32>
    %286 = math.exp %285 : vector<18x18xf32>
    %cst_92 = arith.constant dense<0.000000e+00> : vector<18xf32>
    %287 = vector.multi_reduction <add>, %286, %cst_92 [1] : vector<18x18xf32> to vector<18xf32>
    %288 = vector.shape_cast %287 : vector<18xf32> to vector<18x1xf32>
    %289 = tpu.reciprocal %288 {approx = true} : vector<18x1xf32> -> vector<18x1xf32>
    %290 = vector.broadcast %289 : vector<18x1xf32> to vector<18x18xf32>
    %291 = arith.mulf %286, %290 : vector<18x18xf32>
    %292 = arith.truncf %291 : vector<18x18xf32> to vector<18x18xbf16>
    %293 = vector.broadcast %26 : vector<1x32xf32> to vector<18x32xf32>
    %294 = arith.mulf %229, %293 : vector<18x32xf32>
    %295 = arith.truncf %294 : vector<18x32xf32> to vector<18x32xbf16>
    %cst_93 = arith.constant dense<0.000000e+00> : vector<18x32xf32>
    %296 = tpu.matmul %292, %295, %cst_93 {dimension_numbers = #tpu.dot_dimension_numbers<[1], [0], [0], [1], [0, 0, 1, 1], [], []>} : vector<18x18xbf16>, vector<18x32xbf16>, vector<18x32xf32> -> vector<18x32xf32>
    %297 = arith.addf %275, %296 : vector<18x32xf32>
    %298 = vector.broadcast %33 : vector<1x32xf32> to vector<18x32xf32>
    %299 = arith.mulf %227, %298 : vector<18x32xf32>
    %300 = arith.truncf %299 : vector<18x32xf32> to vector<18x32xbf16>
    %cst_94 = arith.constant dense<0.000000e+00> : vector<18x18xf32>
    %301 = tpu.matmul %300, %230, %cst_94 {dimension_numbers = #tpu.dot_dimension_numbers<[1], [1], [0], [0], [0, 0, 1, 0], [], []>} : vector<18x32xbf16>, vector<18x32xbf16>, vector<18x18xf32> -> vector<18x18xf32>
    %cst_95 = arith.constant -1.000000e+09 : f32
    %302 = vector.broadcast %cst_95 : f32 to vector<18x18xf32>
    %303 = arith.select %4, %301, %302 : vector<18x18xi1>, vector<18x18xf32>
    %cst_96 = arith.constant dense<0xFF800000> : vector<18xf32>
    %304 = vector.multi_reduction <maximumf>, %303, %cst_96 [1] : vector<18x18xf32> to vector<18xf32>
    %305 = vector.shape_cast %304 : vector<18xf32> to vector<18x1xf32>
    %306 = vector.broadcast %305 : vector<18x1xf32> to vector<18x18xf32>
    %307 = arith.subf %303, %306 : vector<18x18xf32>
    %308 = math.exp %307 : vector<18x18xf32>
    %cst_97 = arith.constant dense<0.000000e+00> : vector<18xf32>
    %309 = vector.multi_reduction <add>, %308, %cst_97 [1] : vector<18x18xf32> to vector<18xf32>
    %310 = vector.shape_cast %309 : vector<18xf32> to vector<18x1xf32>
    %311 = tpu.reciprocal %310 {approx = true} : vector<18x1xf32> -> vector<18x1xf32>
    %312 = vector.broadcast %311 : vector<18x1xf32> to vector<18x18xf32>
    %313 = arith.mulf %308, %312 : vector<18x18xf32>
    %314 = arith.truncf %313 : vector<18x18xf32> to vector<18x18xbf16>
    %315 = vector.broadcast %33 : vector<1x32xf32> to vector<18x32xf32>
    %316 = arith.mulf %229, %315 : vector<18x32xf32>
    %317 = arith.truncf %316 : vector<18x32xf32> to vector<18x32xbf16>
    %cst_98 = arith.constant dense<0.000000e+00> : vector<18x32xf32>
    %318 = tpu.matmul %314, %317, %cst_98 {dimension_numbers = #tpu.dot_dimension_numbers<[1], [0], [0], [1], [0, 0, 1, 1], [], []>} : vector<18x18xbf16>, vector<18x32xbf16>, vector<18x32xf32> -> vector<18x32xf32>
    %319 = arith.addf %297, %318 : vector<18x32xf32>
    %320 = arith.truncf %319 : vector<18x32xf32> to vector<18x32xbf16>
    %c1_99 = arith.constant 1 : index
    %c0_100 = arith.constant 0 : index
    %c0_101 = arith.constant 0 : index
    %321 = vector.load %arg9[%c1_99, %c0_100, %c0_101] : memref<2x32x32xbf16, #tpu.memory_space<vmem>>, vector<1x32x32xbf16>
    %322 = vector.shape_cast %321 : vector<1x32x32xbf16> to vector<32x32xbf16>
    %cst_102 = arith.constant dense<0.000000e+00> : vector<18x32xf32>
    %323 = tpu.matmul %320, %322, %cst_102 {dimension_numbers = #tpu.dot_dimension_numbers<[1], [0], [0], [1], [0, 0, 1, 1], [], []>} : vector<18x32xbf16>, vector<32x32xbf16>, vector<18x32xf32> -> vector<18x32xf32>
    %324 = vector.extract_strided_slice %218 {offsets = [0, 0], sizes = [1, 32], strides = [1, 1]} : vector<6x32xf32> to vector<1x32xf32>
    %325 = vector.broadcast %324 : vector<1x32xf32> to vector<18x32xf32>
    %326 = arith.addf %323, %325 : vector<18x32xf32>
    %327 = arith.addf %216, %326 : vector<18x32xf32>
    %328 = vector.extract_strided_slice %218 {offsets = [2, 0], sizes = [1, 32], strides = [1, 1]} : vector<6x32xf32> to vector<1x32xf32>
    %329 = vector.extract_strided_slice %218 {offsets = [3, 0], sizes = [1, 32], strides = [1, 1]} : vector<6x32xf32> to vector<1x32xf32>
    %cst_103 = arith.constant dense<0.000000e+00> : vector<18xf32>
    %330 = vector.multi_reduction <add>, %327, %cst_103 [1] : vector<18x32xf32> to vector<18xf32>
    %331 = vector.shape_cast %330 : vector<18xf32> to vector<18x1xf32>
    %cst_104 = arith.constant 3.200000e+01 : f32
    %332 = vector.broadcast %cst_104 : f32 to vector<18x1xf32>
    %333 = arith.divf %331, %332 : vector<18x1xf32>
    %334 = vector.broadcast %333 : vector<18x1xf32> to vector<18x32xf32>
    %335 = arith.subf %327, %334 : vector<18x32xf32>
    %336 = arith.mulf %335, %335 : vector<18x32xf32>
    %cst_105 = arith.constant dense<0.000000e+00> : vector<18xf32>
    %337 = vector.multi_reduction <add>, %336, %cst_105 [1] : vector<18x32xf32> to vector<18xf32>
    %338 = vector.shape_cast %337 : vector<18xf32> to vector<18x1xf32>
    %cst_106 = arith.constant 3.200000e+01 : f32
    %339 = vector.broadcast %cst_106 : f32 to vector<18x1xf32>
    %340 = arith.divf %338, %339 : vector<18x1xf32>
    %341 = vector.broadcast %333 : vector<18x1xf32> to vector<18x32xf32>
    %342 = arith.subf %327, %341 : vector<18x32xf32>
    %cst_107 = arith.constant 9.99999974E-6 : f32
    %343 = vector.broadcast %cst_107 : f32 to vector<18x1xf32>
    %344 = arith.addf %340, %343 : vector<18x1xf32>
    %345 = math.rsqrt %344 : vector<18x1xf32>
    %346 = vector.broadcast %345 : vector<18x1xf32> to vector<18x32xf32>
    %347 = arith.mulf %342, %346 : vector<18x32xf32>
    %348 = vector.broadcast %328 : vector<1x32xf32> to vector<18x32xf32>
    %349 = arith.mulf %347, %348 : vector<18x32xf32>
    %350 = vector.broadcast %329 : vector<1x32xf32> to vector<18x32xf32>
    %351 = arith.addf %349, %350 : vector<18x32xf32>
    %352 = arith.truncf %351 : vector<18x32xf32> to vector<18x32xbf16>
    %c1_108 = arith.constant 1 : index
    %c0_109 = arith.constant 0 : index
    %c0_110 = arith.constant 0 : index
    %353 = vector.load %arg10[%c1_108, %c0_109, %c0_110] : memref<2x32x64xbf16, #tpu.memory_space<vmem>>, vector<1x32x64xbf16>
    %354 = vector.shape_cast %353 : vector<1x32x64xbf16> to vector<32x64xbf16>
    %cst_111 = arith.constant dense<0.000000e+00> : vector<18x64xf32>
    %355 = tpu.matmul %352, %354, %cst_111 {dimension_numbers = #tpu.dot_dimension_numbers<[1], [0], [0], [1], [0, 0, 1, 1], [], []>} : vector<18x32xbf16>, vector<32x64xbf16>, vector<18x64xf32> -> vector<18x64xf32>
    %c1_112 = arith.constant 1 : index
    %c0_113 = arith.constant 0 : index
    %c0_114 = arith.constant 0 : index
    %356 = vector.load %arg11[%c1_112, %c0_113, %c0_114] : memref<2x1x64xf32, #tpu.memory_space<vmem>>, vector<1x1x64xf32>
    %357 = vector.shape_cast %356 : vector<1x1x64xf32> to vector<1x64xf32>
    %358 = vector.broadcast %357 : vector<1x64xf32> to vector<18x64xf32>
    %359 = arith.addf %355, %358 : vector<18x64xf32>
    %cst_115 = arith.constant 0.000000e+00 : f32
    %360 = vector.broadcast %cst_115 : f32 to vector<18x64xf32>
    %361 = arith.maximumf %359, %360 : vector<18x64xf32>
    %362 = arith.truncf %361 : vector<18x64xf32> to vector<18x64xbf16>
    %c1_116 = arith.constant 1 : index
    %c0_117 = arith.constant 0 : index
    %c0_118 = arith.constant 0 : index
    %363 = vector.load %arg12[%c1_116, %c0_117, %c0_118] : memref<2x64x32xbf16, #tpu.memory_space<vmem>>, vector<1x64x32xbf16>
    %364 = vector.shape_cast %363 : vector<1x64x32xbf16> to vector<64x32xbf16>
    %cst_119 = arith.constant dense<0.000000e+00> : vector<18x32xf32>
    %365 = tpu.matmul %362, %364, %cst_119 {dimension_numbers = #tpu.dot_dimension_numbers<[1], [0], [0], [1], [0, 0, 1, 1], [], []>} : vector<18x64xbf16>, vector<64x32xbf16>, vector<18x32xf32> -> vector<18x32xf32>
    %366 = vector.extract_strided_slice %218 {offsets = [1, 0], sizes = [1, 32], strides = [1, 1]} : vector<6x32xf32> to vector<1x32xf32>
    %367 = vector.broadcast %366 : vector<1x32xf32> to vector<18x32xf32>
    %368 = arith.addf %365, %367 : vector<18x32xf32>
    %369 = arith.addf %351, %368 : vector<18x32xf32>
    %370 = vector.extract_strided_slice %218 {offsets = [4, 0], sizes = [1, 32], strides = [1, 1]} : vector<6x32xf32> to vector<1x32xf32>
    %371 = vector.extract_strided_slice %218 {offsets = [5, 0], sizes = [1, 32], strides = [1, 1]} : vector<6x32xf32> to vector<1x32xf32>
    %cst_120 = arith.constant dense<0.000000e+00> : vector<18xf32>
    %372 = vector.multi_reduction <add>, %369, %cst_120 [1] : vector<18x32xf32> to vector<18xf32>
    %373 = vector.shape_cast %372 : vector<18xf32> to vector<18x1xf32>
    %cst_121 = arith.constant 3.200000e+01 : f32
    %374 = vector.broadcast %cst_121 : f32 to vector<18x1xf32>
    %375 = arith.divf %373, %374 : vector<18x1xf32>
    %376 = vector.broadcast %375 : vector<18x1xf32> to vector<18x32xf32>
    %377 = arith.subf %369, %376 : vector<18x32xf32>
    %378 = arith.mulf %377, %377 : vector<18x32xf32>
    %cst_122 = arith.constant dense<0.000000e+00> : vector<18xf32>
    %379 = vector.multi_reduction <add>, %378, %cst_122 [1] : vector<18x32xf32> to vector<18xf32>
    %380 = vector.shape_cast %379 : vector<18xf32> to vector<18x1xf32>
    %cst_123 = arith.constant 3.200000e+01 : f32
    %381 = vector.broadcast %cst_123 : f32 to vector<18x1xf32>
    %382 = arith.divf %380, %381 : vector<18x1xf32>
    %383 = vector.broadcast %375 : vector<18x1xf32> to vector<18x32xf32>
    %384 = arith.subf %369, %383 : vector<18x32xf32>
    %cst_124 = arith.constant 9.99999974E-6 : f32
    %385 = vector.broadcast %cst_124 : f32 to vector<18x1xf32>
    %386 = arith.addf %382, %385 : vector<18x1xf32>
    %387 = math.rsqrt %386 : vector<18x1xf32>
    %388 = vector.broadcast %387 : vector<18x1xf32> to vector<18x32xf32>
    %389 = arith.mulf %384, %388 : vector<18x32xf32>
    %390 = vector.broadcast %370 : vector<1x32xf32> to vector<18x32xf32>
    %391 = arith.mulf %389, %390 : vector<18x32xf32>
    %392 = vector.broadcast %371 : vector<1x32xf32> to vector<18x32xf32>
    %393 = arith.addf %391, %392 : vector<18x32xf32>
    %c0_125 = arith.constant 0 : index
    %c0_126 = arith.constant 0 : index
    %394 = vector.load %arg6[%c0_125, %c0_126] : memref<2x18xf32, #tpu.memory_space<vmem>>, vector<2x18xf32>
    %cst_127 = arith.constant dense<0.000000e+00> : vector<2x32xf32>
    %395 = tpu.matmul %394, %393, %cst_127 {dimension_numbers = #tpu.dot_dimension_numbers<[1], [0], [0], [1], [0, 0, 1, 1], [], []>} : vector<2x18xf32>, vector<18x32xf32>, vector<2x32xf32> -> vector<2x32xf32>
    %396 = arith.truncf %395 : vector<2x32xf32> to vector<2x32xbf16>
    %c0_128 = arith.constant 0 : index
    %c0_129 = arith.constant 0 : index
    %397 = vector.load %arg14[%c0_128, %c0_129] : memref<32x128xbf16, #tpu.memory_space<vmem>>, vector<32x128xbf16>
    %cst_130 = arith.constant dense<0.000000e+00> : vector<2x128xf32>
    %398 = tpu.matmul %396, %397, %cst_130 {dimension_numbers = #tpu.dot_dimension_numbers<[1], [0], [0], [1], [0, 0, 1, 1], [], []>} : vector<2x32xbf16>, vector<32x128xbf16>, vector<2x128xf32> -> vector<2x128xf32>
    %c0_131 = arith.constant 0 : index
    %c0_132 = arith.constant 0 : index
    %c0_133 = arith.constant 0 : index
    %399 = vector.load %arg16[%c0_131, %c0_132, %c0_133] : memref<2x1x128xf32, #tpu.memory_space<vmem>>, vector<1x1x128xf32>
    %400 = vector.shape_cast %399 : vector<1x1x128xf32> to vector<1x128xf32>
    %401 = vector.broadcast %400 : vector<1x128xf32> to vector<2x128xf32>
    %402 = arith.addf %398, %401 : vector<2x128xf32>
    %cst_134 = arith.constant 0.000000e+00 : f32
    %403 = vector.broadcast %cst_134 : f32 to vector<2x128xf32>
    %404 = arith.maximumf %402, %403 : vector<2x128xf32>
    %405 = arith.truncf %404 : vector<2x128xf32> to vector<2x128xbf16>
    %c0_135 = arith.constant 0 : index
    %c0_136 = arith.constant 0 : index
    %c0_137 = arith.constant 0 : index
    %406 = vector.load %arg15[%c0_135, %c0_136, %c0_137] : memref<1x128x128xbf16, #tpu.memory_space<vmem>>, vector<1x128x128xbf16>
    %407 = vector.shape_cast %406 : vector<1x128x128xbf16> to vector<128x128xbf16>
    %cst_138 = arith.constant dense<0.000000e+00> : vector<2x128xf32>
    %408 = tpu.matmul %405, %407, %cst_138 {dimension_numbers = #tpu.dot_dimension_numbers<[1], [0], [0], [1], [0, 0, 1, 1], [], []>} : vector<2x128xbf16>, vector<128x128xbf16>, vector<2x128xf32> -> vector<2x128xf32>
    %c1_139 = arith.constant 1 : index
    %c0_140 = arith.constant 0 : index
    %c0_141 = arith.constant 0 : index
    %409 = vector.load %arg16[%c1_139, %c0_140, %c0_141] : memref<2x1x128xf32, #tpu.memory_space<vmem>>, vector<1x1x128xf32>
    %410 = vector.shape_cast %409 : vector<1x1x128xf32> to vector<1x128xf32>
    %411 = vector.broadcast %410 : vector<1x128xf32> to vector<2x128xf32>
    %412 = arith.addf %408, %411 : vector<2x128xf32>
    %cst_142 = arith.constant 0.000000e+00 : f32
    %413 = vector.broadcast %cst_142 : f32 to vector<2x128xf32>
    %414 = arith.maximumf %412, %413 : vector<2x128xf32>
    %c0_143 = arith.constant 0 : index
    %c0_144 = arith.constant 0 : index
    %415 = vector.load %arg17[%c0_143, %c0_144] : memref<2x128xf32, #tpu.memory_space<vmem>>, vector<2x128xf32>
    tpu.vector_store %arg17[%c0_143, %c0_144], %414 {strides = array<i32>} : memref<2x128xf32, #tpu.memory_space<vmem>>, vector<2x128xf32>,
    return
  }
  func.func @transform_0(%arg0: i32) -> (i32, i32) {
    %c0_i32 = arith.constant 0 : i32
    %c0_i32_0 = arith.constant 0 : i32
    return %arg0, %c0_i32 : i32, i32
  }
  func.func @transform_1(%arg0: i32) -> (i32, i32) {
    %c0_i32 = arith.constant 0 : i32
    %c0_i32_0 = arith.constant 0 : i32
    %c0_i32_1 = arith.constant 0 : i32
    return %c0_i32, %c0_i32_0 : i32, i32
  }
  func.func @transform_2(%arg0: i32) -> (i32, i32) {
    %c0_i32 = arith.constant 0 : i32
    %c0_i32_0 = arith.constant 0 : i32
    %c0_i32_1 = arith.constant 0 : i32
    return %c0_i32, %c0_i32_0 : i32, i32
  }
  func.func @transform_3(%arg0: i32) -> (i32, i32) {
    %c0_i32 = arith.constant 0 : i32
    %c0_i32_0 = arith.constant 0 : i32
    %c0_i32_1 = arith.constant 0 : i32
    return %c0_i32, %c0_i32_0 : i32, i32
  }
  func.func @transform_4(%arg0: i32) -> (i32, i32) {
    %c0_i32 = arith.constant 0 : i32
    %c0_i32_0 = arith.constant 0 : i32
    %c0_i32_1 = arith.constant 0 : i32
    return %c0_i32, %c0_i32_0 : i32, i32
  }
  func.func @transform_5(%arg0: i32) -> (i32, i32) {
    %c0_i32 = arith.constant 0 : i32
    %c0_i32_0 = arith.constant 0 : i32
    %c0_i32_1 = arith.constant 0 : i32
    return %c0_i32, %c0_i32_0 : i32, i32
  }
  func.func @transform_6(%arg0: i32) -> (i32, i32, i32) {
    %c0_i32 = arith.constant 0 : i32
    %c0_i32_0 = arith.constant 0 : i32
    %c0_i32_1 = arith.constant 0 : i32
    %c0_i32_2 = arith.constant 0 : i32
    return %c0_i32, %c0_i32_0, %c0_i32_1 : i32, i32, i32
  }
  func.func @transform_7(%arg0: i32) -> (i32, i32, i32) {
    %c0_i32 = arith.constant 0 : i32
    %c0_i32_0 = arith.constant 0 : i32
    %c0_i32_1 = arith.constant 0 : i32
    %c0_i32_2 = arith.constant 0 : i32
    return %c0_i32, %c0_i32_0, %c0_i32_1 : i32, i32, i32
  }
  func.func @transform_8(%arg0: i32) -> (i32, i32, i32) {
    %c0_i32 = arith.constant 0 : i32
    %c0_i32_0 = arith.constant 0 : i32
    %c0_i32_1 = arith.constant 0 : i32
    %c0_i32_2 = arith.constant 0 : i32
    return %c0_i32, %c0_i32_0, %c0_i32_1 : i32, i32, i32
  }
  func.func @transform_9(%arg0: i32) -> (i32, i32, i32) {
    %c0_i32 = arith.constant 0 : i32
    %c0_i32_0 = arith.constant 0 : i32
    %c0_i32_1 = arith.constant 0 : i32
    %c0_i32_2 = arith.constant 0 : i32
    return %c0_i32, %c0_i32_0, %c0_i32_1 : i32, i32, i32
  }
  func.func @transform_10(%arg0: i32) -> (i32, i32, i32) {
    %c0_i32 = arith.constant 0 : i32
    %c0_i32_0 = arith.constant 0 : i32
    %c0_i32_1 = arith.constant 0 : i32
    %c0_i32_2 = arith.constant 0 : i32
    return %c0_i32, %c0_i32_0, %c0_i32_1 : i32, i32, i32
  }
  func.func @transform_11(%arg0: i32) -> (i32, i32, i32) {
    %c0_i32 = arith.constant 0 : i32
    %c0_i32_0 = arith.constant 0 : i32
    %c0_i32_1 = arith.constant 0 : i32
    %c0_i32_2 = arith.constant 0 : i32
    return %c0_i32, %c0_i32_0, %c0_i32_1 : i32, i32, i32
  }
  func.func @transform_12(%arg0: i32) -> (i32, i32, i32) {
    %c0_i32 = arith.constant 0 : i32
    %c0_i32_0 = arith.constant 0 : i32
    %c0_i32_1 = arith.constant 0 : i32
    %c0_i32_2 = arith.constant 0 : i32
    return %c0_i32, %c0_i32_0, %c0_i32_1 : i32, i32, i32
  }
  func.func @transform_13(%arg0: i32) -> (i32, i32) {
    %c0_i32 = arith.constant 0 : i32
    %c0_i32_0 = arith.constant 0 : i32
    %c0_i32_1 = arith.constant 0 : i32
    return %c0_i32, %c0_i32_0 : i32, i32
  }
  func.func @transform_14(%arg0: i32) -> (i32, i32, i32) {
    %c0_i32 = arith.constant 0 : i32
    %c0_i32_0 = arith.constant 0 : i32
    %c0_i32_1 = arith.constant 0 : i32
    %c0_i32_2 = arith.constant 0 : i32
    return %c0_i32, %c0_i32_0, %c0_i32_1 : i32, i32, i32
  }
  func.func @transform_15(%arg0: i32) -> (i32, i32, i32) {
    %c0_i32 = arith.constant 0 : i32
    %c0_i32_0 = arith.constant 0 : i32
    %c0_i32_1 = arith.constant 0 : i32
    %c0_i32_2 = arith.constant 0 : i32
    return %c0_i32, %c0_i32_0, %c0_i32_1 : i32, i32, i32
  }
  func.func @transform_16(%arg0: i32) -> (i32, i32) {
    %c0_i32 = arith.constant 0 : i32
    %c0_i32_0 = arith.constant 0 : i32
    return %arg0, %c0_i32 : i32, i32
  }
}

</mosaic_0001>

<llo_original>
// kernel: tile.9
$region0: #{tile.9}
  %s0 = inlined_call_operand.vmem [shape: f32[2,9,32], index: 0, kind: input, shape index: {}]
  %s1 = inlined_call_operand.vmem [shape: f32[18,32], index: 1, kind: output, shape index: {}]
  %v2 = vld [vmem:[%s0] sm:$0xff]
  %vm3 = vcmask 261120
  %4 = vst.msk [vmem:[%s1] sm:$0xff] %vm3, %v2
  %s5 = scalar_lea.vmem %s0, 8
  %s6 = smov 3
  %v7 = vld [vmem:[%s5] ss:$8 sm:%s6]
  %vm8 = vcmask 261120
  %s9 = scalar_lea.vmem %s1, 8
  %10 = vst.msk [vmem:[%s9] sm:$0x3] %vm8, %v7
  %s11 = scalar_lea.vmem %s0, 17
  %v12 = vld [vmem:[%s11] sm:$0xff]
  %vm13 = vcmask 261120
  %s14 = scalar_lea.vmem %s1, 10
  %15 = vst.msk [vmem:[%s14] sm:$0xff] %vm13, %v12

// kernel: cls_transformer_forward.1
$region0: #{cls_transformer_forward.1}
  #allocation0 [shape = 'u32[]', space=smem, size = 0x4, offset = 0x4, fixed_abs, tag = 'smem constant byte address 0x4 - core index']
  #allocation1 [shape = 'u32[72,128]{1,0:T(1,128)}', space=vmem, size = 0x9000, scoped, tag = 'internal scratch']
  %s0 = inlined_call_operand.vmem [shape: f32[18,4], index: 0, kind: input, shape index: {}]
  %s1 = inlined_call_operand.vmem [shape: bf16[4,32], index: 1, kind: input, shape index: {}]
  %s2 = inlined_call_operand.vmem [shape: f32[18,32], index: 2, kind: input, shape index: {}]
  %s3 = inlined_call_operand.vmem [shape: s32[18,1], index: 3, kind: input, shape index: {}]
  %s4 = inlined_call_operand.vmem [shape: s32[1,18], index: 4, kind: input, shape index: {}]
  %s5 = inlined_call_operand.vmem [shape: f32[2,18], index: 5, kind: input, shape index: {}]
  %s6 = inlined_call_operand.vmem [shape: bf16[2,32,96], index: 6, kind: input, shape index: {}]
  %s7 = inlined_call_operand.vmem [shape: f32[2,1,96], index: 7, kind: input, shape index: {}]
  %s8 = inlined_call_operand.vmem [shape: bf16[2,32,32], index: 8, kind: input, shape index: {}]
  %s9 = inlined_call_operand.vmem [shape: bf16[2,32,64], index: 9, kind: input, shape index: {}]
  %s10 = inlined_call_operand.vmem [shape: f32[2,1,64], index: 10, kind: input, shape index: {}]
  %s11 = inlined_call_operand.vmem [shape: bf16[2,64,32], index: 11, kind: input, shape index: {}]
  %s12 = inlined_call_operand.vmem [shape: f32[2,6,32], index: 12, kind: input, shape index: {}]
  %s13 = inlined_call_operand.vmem [shape: bf16[32,128], index: 13, kind: input, shape index: {}]
  %s14 = inlined_call_operand.vmem [shape: bf16[1,128,128], index: 14, kind: input, shape index: {}]
  %s15 = inlined_call_operand.vmem [shape: f32[2,1,128], index: 15, kind: input, shape index: {}]
  %s16 = inlined_call_operand.vmem [shape: f32[2,128], index: 16, kind: output, shape index: {}]
  %s17 = sld [smem:[#allocation0]]
  $region74: #{cls_transformer_forward.1} parent=0
    _
  %s19 = ssub.s32 1, %s17
  %s20 = scalar_select 0, %s19, %s17
  // Predicated region
  $region2: #{cls_transformer_forward.1} parent=0 // pred_check
    _
  $region3: #{cls_transformer_forward.1} parent=0 // pred_check_branch
    %22 = sbr.rel (0) target = $region5
  $region4: #{cls_transformer_forward.1} parent=0 // pred_region
    _
  $region5: #{cls_transformer_forward.1} parent=0 // pred_fallthru
    _
  // Predicated region
  $region6: #{cls_transformer_forward.1} parent=0 // pred_check
    _
  $region7: #{cls_transformer_forward.1} parent=0 // pred_check_branch
    %24 = sbr.rel (0) target = $region9
  $region8: #{cls_transformer_forward.1} parent=0 // pred_region
    _
  $region9: #{cls_transformer_forward.1} parent=0 // pred_fallthru
    _
  // Predicated region
  $region10: #{cls_transformer_forward.1} parent=0 // pred_check
    _
  $region11: #{cls_transformer_forward.1} parent=0 // pred_check_branch
    %26 = sbr.rel (0) target = $region13
  $region12: #{cls_transformer_forward.1} parent=0 // pred_region
    _
  $region13: #{cls_transformer_forward.1} parent=0 // pred_fallthru
    _
  // Predicated region
  $region14: #{cls_transformer_forward.1} parent=0 // pred_check
    _
  $region15: #{cls_transformer_forward.1} parent=0 // pred_check_branch
    %28 = sbr.rel (0) target = $region17
  $region16: #{cls_transformer_forward.1} parent=0 // pred_region
    _
  $region17: #{cls_transformer_forward.1} parent=0 // pred_fallthru
    _
  // Predicated region
  $region18: #{cls_transformer_forward.1} parent=0 // pred_check
    _
  $region19: #{cls_transformer_forward.1} parent=0 // pred_check_branch
    %30 = sbr.rel (0) target = $region21
  $region20: #{cls_transformer_forward.1} parent=0 // pred_region
    _
  $region21: #{cls_transformer_forward.1} parent=0 // pred_fallthru
    _
  // Predicated region
  $region22: #{cls_transformer_forward.1} parent=0 // pred_check
    _
  $region23: #{cls_transformer_forward.1} parent=0 // pred_check_branch
    %32 = sbr.rel (0) target = $region25
  $region24: #{cls_transformer_forward.1} parent=0 // pred_region
    _
  $region25: #{cls_transformer_forward.1} parent=0 // pred_fallthru
    _
  // Predicated region
  $region26: #{cls_transformer_forward.1} parent=0 // pred_check
    _
  $region27: #{cls_transformer_forward.1} parent=0 // pred_check_branch
    %34 = sbr.rel (0) target = $region29
  $region28: #{cls_transformer_forward.1} parent=0 // pred_region
    _
  $region29: #{cls_transformer_forward.1} parent=0 // pred_fallthru
    _
  // Predicated region
  $region30: #{cls_transformer_forward.1} parent=0 // pred_check
    _
  $region31: #{cls_transformer_forward.1} parent=0 // pred_check_branch
    %36 = sbr.rel (0) target = $region33
  $region32: #{cls_transformer_forward.1} parent=0 // pred_region
    _
  $region33: #{cls_transformer_forward.1} parent=0 // pred_fallthru
    _
  // Predicated region
  $region34: #{cls_transformer_forward.1} parent=0 // pred_check
    _
  $region35: #{cls_transformer_forward.1} parent=0 // pred_check_branch
    %38 = sbr.rel (0) target = $region37
  $region36: #{cls_transformer_forward.1} parent=0 // pred_region
    _
  $region37: #{cls_transformer_forward.1} parent=0 // pred_fallthru
    _
  // Predicated region
  $region38: #{cls_transformer_forward.1} parent=0 // pred_check
    _
  $region39: #{cls_transformer_forward.1} parent=0 // pred_check_branch
    %40 = sbr.rel (0) target = $region41
  $region40: #{cls_transformer_forward.1} parent=0 // pred_region
    _
  $region41: #{cls_transformer_forward.1} parent=0 // pred_fallthru
    _
  // Predicated region
  $region42: #{cls_transformer_forward.1} parent=0 // pred_check
    _
  $region43: #{cls_transformer_forward.1} parent=0 // pred_check_branch
    %42 = sbr.rel (0) target = $region45
  $region44: #{cls_transformer_forward.1} parent=0 // pred_region
    _
  $region45: #{cls_transformer_forward.1} parent=0 // pred_fallthru
    _
  // Predicated region
  $region46: #{cls_transformer_forward.1} parent=0 // pred_check
    _
  $region47: #{cls_transformer_forward.1} parent=0 // pred_check_branch
    %44 = sbr.rel (0) target = $region49
  $region48: #{cls_transformer_forward.1} parent=0 // pred_region
    _
  $region49: #{cls_transformer_forward.1} parent=0 // pred_fallthru
    _
  // Predicated region
  $region50: #{cls_transformer_forward.1} parent=0 // pred_check
    _
  $region51: #{cls_transformer_forward.1} parent=0 // pred_check_branch
    %46 = sbr.rel (0) target = $region53
  $region52: #{cls_transformer_forward.1} parent=0 // pred_region
    _
  $region53: #{cls_transformer_forward.1} parent=0 // pred_fallthru
    _
  // Predicated region
  $region54: #{cls_transformer_forward.1} parent=0 // pred_check
    _
  $region55: #{cls_transformer_forward.1} parent=0 // pred_check_branch
    %48 = sbr.rel (0) target = $region57
  $region56: #{cls_transformer_forward.1} parent=0 // pred_region
    _
  $region57: #{cls_transformer_forward.1} parent=0 // pred_fallthru
    _
  // Predicated region
  $region58: #{cls_transformer_forward.1} parent=0 // pred_check
    _
  $region59: #{cls_transformer_forward.1} parent=0 // pred_check_branch
    %50 = sbr.rel (0) target = $region61
  $region60: #{cls_transformer_forward.1} parent=0 // pred_region
    _
  $region61: #{cls_transformer_forward.1} parent=0 // pred_fallthru
    _
  // Predicated region
  $region62: #{cls_transformer_forward.1} parent=0 // pred_check
    _
  $region63: #{cls_transformer_forward.1} parent=0 // pred_check_branch
    %52 = sbr.rel (0) target = $region65
  $region64: #{cls_transformer_forward.1} parent=0 // pred_region
    _
  $region65: #{cls_transformer_forward.1} parent=0 // pred_fallthru
    _
  %v54 = vld [vmem:[%s3] sm:$0xff]
  %v55 = vld [vmem:[%s3 + $0x8] sm:$0xff]
  %v56 = vld [vmem:[%s3 + $0x10] sm:$0x3]
  %v57 = vld [vmem:[%s4] sm:$0x1]
  %58 = vset.pattern.permute.xlu0 0
  %59 = vperm.xlu0 %58, %v54
  %v60 = vpop.permute.xlu0 %59
  %61 = vset.pattern.permute.xlu0 0
  %62 = vperm.xlu0 %61, %v55
  %v63 = vpop.permute.xlu0 %62
  %64 = vset.pattern.permute.xlu0 0
  %65 = vperm.xlu0 %64, %v56
  %v66 = vpop.permute.xlu0 %65
  %v67 = vperm.slane %v57, 0
  %vm68 = vcmp.eq.s32.totalorder %v60, %v67
  %vm69 = vcmp.eq.s32.totalorder %v63, %v67
  %vm70 = vcmp.eq.s32.totalorder %v66, %v67
  %v71 = vlaneseq
  %v72 = vand.u32 %v71, 127
  %vm73 = vcmp.ge.s32.totalorder %v72, 0
  %vm74 = vcmp.lt.s32.totalorder %v72, 8
  %vm75 = vmand %vm73, %vm74
  %v76 = vsel %vm75, 1, 0
  %v77 = vcvt.s32.f32 %v76
  %vm78 = vcmp.ge.s32.totalorder %v72, 8
  %vm79 = vcmp.lt.s32.totalorder %v72, 16
  %vm80 = vmand %vm78, %vm79
  %v81 = vsel %vm80, 1, 0
  %v82 = vcvt.s32.f32 %v81
  %vm83 = vcmp.ge.s32.totalorder %v72, 16
  %vm84 = vcmp.lt.s32.totalorder %v72, 24
  %vm85 = vmand %vm83, %vm84
  %v86 = vsel %vm85, 1, 0
  %v87 = vcvt.s32.f32 %v86
  %vm88 = vcmp.ge.s32.totalorder %v72, 24
  %vm89 = vcmp.lt.s32.totalorder %v72, 32
  %vm90 = vmand %vm88, %vm89
  %v91 = vsel %vm90, 1, 0
  %v92 = vcvt.s32.f32 %v91
  %v93 = vld [vmem:[%s0] sm:$0xff]
  %v94 = vld [vmem:[%s0 + $0x8] sm:$0xff]
  %v95 = vld [vmem:[%s0 + $0x10] sm:$0x3]
  %v96 = vpack.c.bf16 %v94, %v93
  %v97 = vpack.c.bf16 %v95, %v95
  %v98 = vld [vmem:[%s1] sm:$0x3]
  %v99 = vld [vmem:[%s2] sm:$0xff]
  %v100 = vld [vmem:[%s2 + $0x8] sm:$0xff]
  %v101 = vld [vmem:[%s2 + $0x10] sm:$0x3]
  %vm102 = vcmask 31744
  %v104 = vsel %vm102, %v96, 0
  %v107 = vsel %vm102, %v97, 0
  %vm109 = vcmask 1041408
  %v111 = vsel %vm109, %v98, 0
  %113 = vmatpush.bf16.msra.mxu0 0
  %114 = vmatpush.bf16.msra.mxu0 0
  %115 = vmatpush.bf16.msra.mxu0 0
  %116 = vmatpush.bf16.msra.mxu0 0
  %117 = vmatpush.bf16.msra.mxu0 0
  %118 = vmatpush.bf16.msra.mxu0 0
  %119 = vmatpush.bf16.msra.mxu0 0
  %120 = vmatpush.bf16.msra.mxu0 %v111
  %121 = vmatmul.bf16.gmra.mxu0 %v104
  %v122 = vpop.f32.mrf.mxu0
  %v123 = vadd.f32 %v99, %v122
  %v124 = vpop.f32.mrf.mxu0
  %v125 = vadd.f32 %v100, %v124
  %126 = vmatmul.bf16.gmra.mxu0 %v107
  %v127 = vpop.f32.mrf.mxu0
  %v128 = vadd.f32 %v101, %v127
  %v129 = vpop.f32.mrf.mxu0
  %130 = vdwg.mxu0
  %v131 = vld [vmem:[%s12] sm:$0x3f]
  %v132 = vpack.c.bf16 %v125, %v123
  %v133 = vpack.c.bf16 %v128, %v128
  %v134 = vld [vmem:[%s6] sm:$0xf]
  %v135 = vld [vmem:[%s6 + $0x4] sm:$0xf]
  %v136 = vld [vmem:[%s6 + $0x8] sm:$0xf]
  %v137 = vld [vmem:[%s6 + $0xc] sm:$0xf]
  %v138 = vld [vmem:[%s7] sm:$0x1]
  %v140 = vperm.slane %v138, 0
  %v146 = vunpack.c.l.b16 %v134
  %v147 = vunpack.c.l.b16 %v135
  %v148 = vunpack.c.l.b16 %v136
  %v149 = vunpack.c.l.b16 %v137
  %v150 = vpack.c.b16 %v147, %v146
  %v151 = vpack.c.b16 %v149, %v148
  %vm154 = vcmask 261120
  %v156 = vsel %vm154, %v132, 0
  %v159 = vsel %vm154, %v133, 0
  %161 = vmatpush.bf16.msra.mxu0 0
  %162 = vmatpush.bf16.msra.mxu0 0
  %163 = vmatpush.bf16.msra.mxu0 0
  %164 = vmatpush.bf16.msra.mxu0 0
  %165 = vmatpush.bf16.msra.mxu0 0
  %166 = vmatpush.bf16.msra.mxu0 0
  %167 = vmatpush.bf16.msra.mxu0 %v151
  %168 = vmatpush.bf16.msra.mxu0 %v150
  %169 = vmatmul.bf16.gmra.mxu0 %v156
  %v170 = vpop.f32.mrf.mxu0
  %v171 = vadd.f32 %v140, %v170
  %v172 = vpop.f32.mrf.mxu0
  %v173 = vadd.f32 %v140, %v172
  %174 = vmatmul.bf16.gmra.mxu0 %v159
  %v175 = vpop.f32.mrf.mxu0
  %v176 = vadd.f32 %v140, %v175
  %v177 = vpop.f32.mrf.mxu0
  %178 = vdwg.mxu0
  %v179 = vpack.c.bf16 %v173, %v171
  %v180 = vpack.c.bf16 %v176, %v176
  %v181 = vmul.f32 %v171, %v77
  %v182 = vmul.f32 %v173, %v77
  %v183 = vmul.f32 %v176, %v77
  %v184 = vpack.c.bf16 %v182, %v181
  %v185 = vpack.c.bf16 %v183, %v183
  %188 = vrot.lane.b32.xlu0 %v179, 96
  %v189 = vpop.permute.xlu0 %188
  %190 = vrot.lane.b32.xlu0 %v180, 96
  %v191 = vpop.permute.xlu0 %190
  %v193 = vsel %vm154, %v184, 0
  %v196 = vsel %vm154, %v185, 0
  %v199 = vsel %vm154, %v189, 0
  %v202 = vsel %vm154, %v191, 0
  %204 = vmatpush.bf16.xpose.msra.mxu0 0
  %205 = vmatpush.bf16.xpose.msra.mxu0 0
  %206 = vmatpush.bf16.xpose.msra.mxu0 0
  %207 = vmatpush.bf16.xpose.msra.mxu0 0
  %208 = vmatpush.bf16.xpose.msra.mxu0 0
  %209 = vmatpush.bf16.xpose.msra.mxu0 0
  %210 = vmatpush.bf16.xpose.msra.mxu0 %v202
  %211 = vmatpush.bf16.xpose.msra.mxu0 %v199
  %212 = vmatmul.bf16.gmra.mxu0 %v193
  %v213 = vpop.f32.mrf.mxu0
  %v214 = vadd.f32 0.0, %v213
  %v215 = vpop.f32.mrf.mxu0
  %v216 = vadd.f32 0.0, %v215
  %217 = vmatmul.bf16.gmra.mxu0 %v196
  %v218 = vpop.f32.mrf.mxu0
  %v219 = vadd.f32 0.0, %v218
  %v220 = vpop.f32.mrf.mxu0
  %221 = vdwg.mxu0
  %v222 = vsel %vm68, %v214, -1e+09
  %v223 = vsel %vm69, %v216, -1e+09
  %v224 = vsel %vm70, %v219, -1e+09
  %vm225 = vcmask 146432
  %v226 = vsel %vm225, %v222, -inf
  %227 = vmax.xlane.f32.xlu0 %v226
  %v228 = vpop.xlane.xlu0 %227
  %v229 = vsel %vm225, %v223, -inf
  %230 = vmax.xlane.f32.xlu0 %v229
  %v231 = vpop.xlane.xlu0 %230
  %vm232 = vcmask 140288
  %v233 = vsel %vm232, %v224, -inf
  %234 = vmax.xlane.f32.xlu0 %v233
  %v235 = vpop.xlane.xlu0 %234
  %v236 = vsub.f32 %v222, %v228
  %v237 = vsub.f32 %v223, %v231
  %v238 = vsub.f32 %v224, %v235
  %v239 = vmul.f32 %v236, 1.442695
  %v240 = vpow.pop %v239
  %v241 = vmul.f32 %v237, 1.442695
  %v242 = vpow.pop %v241
  %v243 = vmul.f32 %v238, 1.442695
  %v244 = vpow.pop %v243
  %v245 = vsel %vm225, %v240, 0.0
  %246 = vadd.xlane.f32.xlu0 %v245
  %v247 = vpop.xlane.xlu0 %246
  %v248 = vsel %vm225, %v242, 0.0
  %249 = vadd.xlane.f32.xlu0 %v248
  %v250 = vpop.xlane.xlu0 %249
  %v251 = vsel %vm232, %v244, 0.0
  %252 = vadd.xlane.f32.xlu0 %v251
  %v253 = vpop.xlane.xlu0 %252
  %v254 = vrcp.pop %v247
  %v255 = vrcp.pop %v250
  %v256 = vrcp.pop %v253
  %v257 = vmul.f32 %v240, %v254
  %v258 = vmul.f32 %v242, %v255
  %v259 = vmul.f32 %v244, %v256
  %v260 = vpack.c.bf16 %v258, %v257
  %v261 = vpack.c.bf16 %v259, %v259
  %263 = vrot.lane.b32.xlu0 %v77, 64
  %v264 = vpop.permute.xlu0 %263
  %v266 = vmul.f32 %v171, %v264
  %v267 = vmul.f32 %v173, %v264
  %v268 = vmul.f32 %v176, %v264
  %v269 = vpack.c.bf16 %v267, %v266
  %v270 = vpack.c.bf16 %v268, %v268
  %v271 = vmul.f32 %v171, %v82
  %v272 = vmul.f32 %v173, %v82
  %v273 = vmul.f32 %v176, %v82
  %v274 = vpack.c.bf16 %v272, %v271
  %v275 = vpack.c.bf16 %v273, %v273
  %v277 = vsel %vm154, %v274, 0
  %v280 = vsel %vm154, %v275, 0
  %282 = vmatpush.bf16.xpose.msra.mxu0 0
  %283 = vmatpush.bf16.xpose.msra.mxu0 0
  %284 = vmatpush.bf16.xpose.msra.mxu0 0
  %285 = vmatpush.bf16.xpose.msra.mxu0 0
  %286 = vmatpush.bf16.xpose.msra.mxu0 0
  %287 = vmatpush.bf16.xpose.msra.mxu0 0
  %288 = vmatpush.bf16.xpose.msra.mxu0 %v202
  %289 = vmatpush.bf16.xpose.msra.mxu0 %v199
  %290 = vmatmul.bf16.gmra.mxu0 %v277
  %v291 = vpop.f32.mrf.mxu0
  %v292 = vadd.f32 0.0, %v291
  %v293 = vpop.f32.mrf.mxu0
  %v294 = vadd.f32 0.0, %v293
  %295 = vmatmul.bf16.gmra.mxu0 %v280
  %v296 = vpop.f32.mrf.mxu0
  %v297 = vadd.f32 0.0, %v296
  %v298 = vpop.f32.mrf.mxu0
  %299 = vdwg.mxu0
  %v300 = vsel %vm68, %v292, -1e+09
  %v301 = vsel %vm69, %v294, -1e+09
  %v302 = vsel %vm70, %v297, -1e+09
  %v303 = vsel %vm225, %v300, -inf
  %304 = vmax.xlane.f32.xlu0 %v303
  %v305 = vpop.xlane.xlu0 %304
  %v306 = vsel %vm225, %v301, -inf
  %307 = vmax.xlane.f32.xlu0 %v306
  %v308 = vpop.xlane.xlu0 %307
  %v309 = vsel %vm232, %v302, -inf
  %310 = vmax.xlane.f32.xlu0 %v309
  %v311 = vpop.xlane.xlu0 %310
  %v312 = vsub.f32 %v300, %v305
  %v313 = vsub.f32 %v301, %v308
  %v314 = vsub.f32 %v302, %v311
  %v315 = vmul.f32 %v312, 1.442695
  %v316 = vpow.pop %v315
  %v317 = vmul.f32 %v313, 1.442695
  %v318 = vpow.pop %v317
  %v319 = vmul.f32 %v314, 1.442695
  %v320 = vpow.pop %v319
  %v321 = vsel %vm225, %v316, 0.0
  %322 = vadd.xlane.f32.xlu0 %v321
  %v323 = vpop.xlane.xlu0 %322
  %v324 = vsel %vm225, %v318, 0.0
  %325 = vadd.xlane.f32.xlu0 %v324
  %v326 = vpop.xlane.xlu0 %325
  %v327 = vsel %vm232, %v320, 0.0
  %328 = vadd.xlane.f32.xlu0 %v327
  %v329 = vpop.xlane.xlu0 %328
  %v330 = vrcp.pop %v323
  %v331 = vrcp.pop %v326
  %v332 = vrcp.pop %v329
  %v333 = vmul.f32 %v316, %v330
  %v334 = vmul.f32 %v318, %v331
  %v335 = vmul.f32 %v320, %v332
  %v336 = vpack.c.bf16 %v334, %v333
  %v337 = vpack.c.bf16 %v335, %v335
  %339 = vrot.lane.b32.xlu0 %v82, 64
  %v340 = vpop.permute.xlu0 %339
  %v342 = vmul.f32 %v171, %v340
  %v343 = vmul.f32 %v173, %v340
  %v344 = vmul.f32 %v176, %v340
  %v345 = vpack.c.bf16 %v343, %v342
  %v346 = vpack.c.bf16 %v344, %v344
  %349 = vrot.lane.b32.xlu0 %v345, 64
  %v350 = vpop.permute.xlu0 %349
  %351 = vrot.lane.b32.xlu0 %v346, 64
  %v352 = vpop.permute.xlu0 %351
  %v355 = vsel %vm225, %v336, 0
  %v358 = vsel %vm225, %v337, 0
  %vm360 = vcmask 1040384
  %v362 = vsel %vm360, %v352, 0
  %364 = vmatpush.bf16.msra.mxu0 0
  %365 = vmatpush.bf16.msra.mxu0 0
  %366 = vmatpush.bf16.msra.mxu0 0
  %367 = vmatpush.bf16.msra.mxu0 0
  %368 = vmatpush.bf16.msra.mxu0 0
  %369 = vmatpush.bf16.msra.mxu0 0
  %370 = vmatpush.bf16.msra.mxu0 %v362
  %371 = vmatpush.bf16.msra.mxu0 %v350
  %372 = vmatmul.bf16.gmra.mxu0 %v355
  %v373 = vpop.f32.mrf.mxu0
  %v374 = vadd.f32 0.0, %v373
  %v375 = vpop.f32.mrf.mxu0
  %v376 = vadd.f32 0.0, %v375
  %377 = vmatmul.bf16.gmra.mxu0 %v358
  %v378 = vpop.f32.mrf.mxu0
  %v379 = vadd.f32 0.0, %v378
  %v380 = vpop.f32.mrf.mxu0
  %381 = vdwg.mxu0
  %384 = vrot.lane.b32.xlu0 %v269, 64
  %v385 = vpop.permute.xlu0 %384
  %386 = vrot.lane.b32.xlu0 %v270, 64
  %v387 = vpop.permute.xlu0 %386
  %v390 = vsel %vm225, %v260, 0
  %v393 = vsel %vm225, %v261, 0
  %v396 = vsel %vm360, %v387, 0
  %398 = vmatpush.bf16.msra.mxu0 0
  %399 = vmatpush.bf16.msra.mxu0 0
  %400 = vmatpush.bf16.msra.mxu0 0
  %401 = vmatpush.bf16.msra.mxu0 0
  %402 = vmatpush.bf16.msra.mxu0 0
  %403 = vmatpush.bf16.msra.mxu0 0
  %404 = vmatpush.bf16.msra.mxu0 %v396
  %405 = vmatpush.bf16.msra.mxu0 %v385
  %406 = vmatmul.bf16.gmra.mxu0 %v390
  %v407 = vpop.f32.mrf.mxu0
  %v408 = vadd.f32 %v374, %v407
  %v409 = vpop.f32.mrf.mxu0
  %v410 = vadd.f32 %v376, %v409
  %411 = vmatmul.bf16.gmra.mxu0 %v393
  %v412 = vpop.f32.mrf.mxu0
  %v413 = vadd.f32 %v379, %v412
  %v414 = vpop.f32.mrf.mxu0
  %415 = vdwg.mxu0
  %v416 = vmul.f32 %v171, %v87
  %v417 = vmul.f32 %v173, %v87
  %v418 = vmul.f32 %v176, %v87
  %v419 = vpack.c.bf16 %v417, %v416
  %v420 = vpack.c.bf16 %v418, %v418
  %v422 = vsel %vm154, %v419, 0
  %v425 = vsel %vm154, %v420, 0
  %427 = vmatpush.bf16.xpose.msra.mxu0 0
  %428 = vmatpush.bf16.xpose.msra.mxu0 0
  %429 = vmatpush.bf16.xpose.msra.mxu0 0
  %430 = vmatpush.bf16.xpose.msra.mxu0 0
  %431 = vmatpush.bf16.xpose.msra.mxu0 0
  %432 = vmatpush.bf16.xpose.msra.mxu0 0
  %433 = vmatpush.bf16.xpose.msra.mxu0 %v202
  %434 = vmatpush.bf16.xpose.msra.mxu0 %v199
  %435 = vmatmul.bf16.gmra.mxu0 %v422
  %v436 = vpop.f32.mrf.mxu0
  %v437 = vadd.f32 0.0, %v436
  %v438 = vpop.f32.mrf.mxu0
  %v439 = vadd.f32 0.0, %v438
  %440 = vmatmul.bf16.gmra.mxu0 %v425
  %v441 = vpop.f32.mrf.mxu0
  %v442 = vadd.f32 0.0, %v441
  %v443 = vpop.f32.mrf.mxu0
  %444 = vdwg.mxu0
  %v445 = vsel %vm68, %v437, -1e+09
  %v446 = vsel %vm69, %v439, -1e+09
  %v447 = vsel %vm70, %v442, -1e+09
  %v448 = vsel %vm225, %v445, -inf
  %449 = vmax.xlane.f32.xlu0 %v448
  %v450 = vpop.xlane.xlu0 %449
  %v451 = vsel %vm225, %v446, -inf
  %452 = vmax.xlane.f32.xlu0 %v451
  %v453 = vpop.xlane.xlu0 %452
  %v454 = vsel %vm232, %v447, -inf
  %455 = vmax.xlane.f32.xlu0 %v454
  %v456 = vpop.xlane.xlu0 %455
  %v457 = vsub.f32 %v445, %v450
  %v458 = vsub.f32 %v446, %v453
  %v459 = vsub.f32 %v447, %v456
  %v460 = vmul.f32 %v457, 1.442695
  %v461 = vpow.pop %v460
  %v462 = vmul.f32 %v458, 1.442695
  %v463 = vpow.pop %v462
  %v464 = vmul.f32 %v459, 1.442695
  %v465 = vpow.pop %v464
  %v466 = vsel %vm225, %v461, 0.0
  %467 = vadd.xlane.f32.xlu0 %v466
  %v468 = vpop.xlane.xlu0 %467
  %v469 = vsel %vm225, %v463, 0.0
  %470 = vadd.xlane.f32.xlu0 %v469
  %v471 = vpop.xlane.xlu0 %470
  %v472 = vsel %vm232, %v465, 0.0
  %473 = vadd.xlane.f32.xlu0 %v472
  %v474 = vpop.xlane.xlu0 %473
  %v475 = vrcp.pop %v468
  %v476 = vrcp.pop %v471
  %v477 = vrcp.pop %v474
  %v478 = vmul.f32 %v461, %v475
  %v479 = vmul.f32 %v463, %v476
  %v480 = vmul.f32 %v465, %v477
  %v481 = vpack.c.bf16 %v479, %v478
  %v482 = vpack.c.bf16 %v480, %v480
  %484 = vrot.lane.b32.xlu0 %v87, 64
  %v485 = vpop.permute.xlu0 %484
  %v487 = vmul.f32 %v171, %v485
  %v488 = vmul.f32 %v173, %v485
  %v489 = vmul.f32 %v176, %v485
  %v490 = vpack.c.bf16 %v488, %v487
  %v491 = vpack.c.bf16 %v489, %v489
  %494 = vrot.lane.b32.xlu0 %v490, 64
  %v495 = vpop.permute.xlu0 %494
  %496 = vrot.lane.b32.xlu0 %v491, 64
  %v497 = vpop.permute.xlu0 %496
  %v500 = vsel %vm225, %v481, 0
  %v503 = vsel %vm225, %v482, 0
  %v506 = vsel %vm360, %v497, 0
  %508 = vmatpush.bf16.msra.mxu0 0
  %509 = vmatpush.bf16.msra.mxu0 0
  %510 = vmatpush.bf16.msra.mxu0 0
  %511 = vmatpush.bf16.msra.mxu0 0
  %512 = vmatpush.bf16.msra.mxu0 0
  %513 = vmatpush.bf16.msra.mxu0 0
  %514 = vmatpush.bf16.msra.mxu0 %v506
  %515 = vmatpush.bf16.msra.mxu0 %v495
  %516 = vmatmul.bf16.gmra.mxu0 %v500
  %v517 = vpop.f32.mrf.mxu0
  %v518 = vadd.f32 0.0, %v517
  %v519 = vpop.f32.mrf.mxu0
  %v520 = vadd.f32 0.0, %v519
  %521 = vmatmul.bf16.gmra.mxu0 %v503
  %v522 = vpop.f32.mrf.mxu0
  %v523 = vadd.f32 0.0, %v522
  %v524 = vpop.f32.mrf.mxu0
  %525 = vdwg.mxu0
  %v526 = vadd.f32 %v408, %v518
  %v527 = vadd.f32 %v410, %v520
  %v528 = vadd.f32 %v413, %v523
  %v529 = vmul.f32 %v171, %v92
  %v530 = vmul.f32 %v173, %v92
  %v531 = vmul.f32 %v176, %v92
  %v532 = vpack.c.bf16 %v530, %v529
  %v533 = vpack.c.bf16 %v531, %v531
  %v535 = vsel %vm154, %v532, 0
  %v538 = vsel %vm154, %v533, 0
  %540 = vmatpush.bf16.xpose.msra.mxu0 0
  %541 = vmatpush.bf16.xpose.msra.mxu0 0
  %542 = vmatpush.bf16.xpose.msra.mxu0 0
  %543 = vmatpush.bf16.xpose.msra.mxu0 0
  %544 = vmatpush.bf16.xpose.msra.mxu0 0
  %545 = vmatpush.bf16.xpose.msra.mxu0 0
  %546 = vmatpush.bf16.xpose.msra.mxu0 %v202
  %547 = vmatpush.bf16.xpose.msra.mxu0 %v199
  %548 = vmatmul.bf16.gmra.mxu0 %v535
  %v549 = vpop.f32.mrf.mxu0
  %v550 = vadd.f32 0.0, %v549
  %v551 = vpop.f32.mrf.mxu0
  %v552 = vadd.f32 0.0, %v551
  %553 = vmatmul.bf16.gmra.mxu0 %v538
  %v554 = vpop.f32.mrf.mxu0
  %v555 = vadd.f32 0.0, %v554
  %v556 = vpop.f32.mrf.mxu0
  %557 = vdwg.mxu0
  %v558 = vsel %vm68, %v550, -1e+09
  %v559 = vsel %vm69, %v552, -1e+09
  %v560 = vsel %vm70, %v555, -1e+09
  %v561 = vsel %vm225, %v558, -inf
  %562 = vmax.xlane.f32.xlu0 %v561
  %v563 = vpop.xlane.xlu0 %562
  %v564 = vsel %vm225, %v559, -inf
  %565 = vmax.xlane.f32.xlu0 %v564
  %v566 = vpop.xlane.xlu0 %565
  %v567 = vsel %vm232, %v560, -inf
  %568 = vmax.xlane.f32.xlu0 %v567
  %v569 = vpop.xlane.xlu0 %568
  %v570 = vsub.f32 %v558, %v563
  %v571 = vsub.f32 %v559, %v566
  %v572 = vsub.f32 %v560, %v569
  %v573 = vmul.f32 %v570, 1.442695
  %v574 = vpow.pop %v573
  %v575 = vmul.f32 %v571, 1.442695
  %v576 = vpow.pop %v575
  %v577 = vmul.f32 %v572, 1.442695
  %v578 = vpow.pop %v577
  %v579 = vsel %vm225, %v574, 0.0
  %580 = vadd.xlane.f32.xlu0 %v579
  %v581 = vpop.xlane.xlu0 %580
  %v582 = vsel %vm225, %v576, 0.0
  %583 = vadd.xlane.f32.xlu0 %v582
  %v584 = vpop.xlane.xlu0 %583
  %v585 = vsel %vm232, %v578, 0.0
  %586 = vadd.xlane.f32.xlu0 %v585
  %v587 = vpop.xlane.xlu0 %586
  %v588 = vrcp.pop %v581
  %v589 = vrcp.pop %v584
  %v590 = vrcp.pop %v587
  %v591 = vmul.f32 %v574, %v588
  %v592 = vmul.f32 %v576, %v589
  %v593 = vmul.f32 %v578, %v590
  %v594 = vpack.c.bf16 %v592, %v591
  %v595 = vpack.c.bf16 %v593, %v593
  %597 = vrot.lane.b32.xlu0 %v92, 64
  %v598 = vpop.permute.xlu0 %597
  %v600 = vmul.f32 %v171, %v598
  %v601 = vmul.f32 %v173, %v598
  %v602 = vmul.f32 %v176, %v598
  %v603 = vpack.c.bf16 %v601, %v600
  %v604 = vpack.c.bf16 %v602, %v602
  %607 = vrot.lane.b32.xlu0 %v603, 64
  %v608 = vpop.permute.xlu0 %607
  %609 = vrot.lane.b32.xlu0 %v604, 64
  %v610 = vpop.permute.xlu0 %609
  %v613 = vsel %vm225, %v594, 0
  %v616 = vsel %vm225, %v595, 0
  %v619 = vsel %vm360, %v610, 0
  %621 = vmatpush.bf16.msra.mxu0 0
  %622 = vmatpush.bf16.msra.mxu0 0
  %623 = vmatpush.bf16.msra.mxu0 0
  %624 = vmatpush.bf16.msra.mxu0 0
  %625 = vmatpush.bf16.msra.mxu0 0
  %626 = vmatpush.bf16.msra.mxu0 0
  %627 = vmatpush.bf16.msra.mxu0 %v619
  %628 = vmatpush.bf16.msra.mxu0 %v608
  %629 = vmatmul.bf16.gmra.mxu0 %v613
  %v630 = vpop.f32.mrf.mxu0
  %v631 = vadd.f32 0.0, %v630
  %v632 = vpop.f32.mrf.mxu0
  %v633 = vadd.f32 0.0, %v632
  %634 = vmatmul.bf16.gmra.mxu0 %v616
  %v635 = vpop.f32.mrf.mxu0
  %v636 = vadd.f32 0.0, %v635
  %v637 = vpop.f32.mrf.mxu0
  %638 = vdwg.mxu0
  %v639 = vadd.f32 %v526, %v631
  %v640 = vadd.f32 %v527, %v633
  %v641 = vadd.f32 %v528, %v636
  %v642 = vpack.c.bf16 %v640, %v639
  %v643 = vpack.c.bf16 %v641, %v641
  %v644 = vld [vmem:[%s8] sm:$0xf]
  %v645 = vld [vmem:[%s8 + $0x4] sm:$0xf]
  %v646 = vld [vmem:[%s8 + $0x8] sm:$0xf]
  %v647 = vld [vmem:[%s8 + $0xc] sm:$0xf]
  %v648 = vperm.slane %v131, 0
  %v653 = vunpack.c.l.b16 %v644
  %v654 = vunpack.c.l.b16 %v645
  %v655 = vunpack.c.l.b16 %v646
  %v656 = vunpack.c.l.b16 %v647
  %v657 = vpack.c.b16 %v654, %v653
  %v658 = vpack.c.b16 %v656, %v655
  %v662 = vsel %vm154, %v642, 0
  %v665 = vsel %vm154, %v643, 0
  %667 = vmatpush.bf16.msra.mxu0 0
  %668 = vmatpush.bf16.msra.mxu0 0
  %669 = vmatpush.bf16.msra.mxu0 0
  %670 = vmatpush.bf16.msra.mxu0 0
  %671 = vmatpush.bf16.msra.mxu0 0
  %672 = vmatpush.bf16.msra.mxu0 0
  %673 = vmatpush.bf16.msra.mxu0 %v658
  %674 = vmatpush.bf16.msra.mxu0 %v657
  %675 = vmatmul.bf16.gmra.mxu0 %v662
  %v676 = vpop.f32.mrf.mxu0
  %v677 = vadd.f32 %v648, %v676
  %v678 = vpop.f32.mrf.mxu0
  %v679 = vadd.f32 %v648, %v678
  %680 = vmatmul.bf16.gmra.mxu0 %v665
  %v681 = vpop.f32.mrf.mxu0
  %v682 = vadd.f32 %v648, %v681
  %v683 = vpop.f32.mrf.mxu0
  %684 = vdwg.mxu0
  %v685 = vadd.f32 %v123, %v677
  %v686 = vadd.f32 %v125, %v679
  %v687 = vadd.f32 %v128, %v682
  %v688 = vsel %vm154, %v685, 0.0
  %689 = vadd.xlane.f32.xlu0 %v688
  %v690 = vpop.xlane.xlu0 %689
  %v691 = vsel %vm154, %v686, 0.0
  %692 = vadd.xlane.f32.xlu0 %v691
  %v693 = vpop.xlane.xlu0 %692
  %vm694 = vcmask 254976
  %v695 = vsel %vm694, %v687, 0.0
  %696 = vadd.xlane.f32.xlu0 %v695
  %v697 = vpop.xlane.xlu0 %696
  %v698 = vrcp.pop 32.0
  %v699 = vmul.f32 32.0, %v698
  %v700 = vsub.f32 1.0, %v699
  %v701 = vmul.f32 %v698, %v700
  %v702 = vadd.f32 %v698, %v701
  %vm703 = vweird.f32 %v698
  %v704 = vsel %vm703, %v698, %v702
  %v705 = vmul.f32 %v690, %v704
  %v706 = vmul.f32 %v693, %v704
  %v707 = vmul.f32 %v697, %v704
  %v708 = vsub.f32 %v685, %v705
  %v709 = vsub.f32 %v686, %v706
  %v710 = vsub.f32 %v687, %v707
  %v711 = vmul.f32 %v708, %v708
  %v712 = vmul.f32 %v709, %v709
  %v713 = vmul.f32 %v710, %v710
  %v714 = vsel %vm154, %v711, 0.0
  %715 = vadd.xlane.f32.xlu0 %v714
  %v716 = vpop.xlane.xlu0 %715
  %v717 = vsel %vm154, %v712, 0.0
  %718 = vadd.xlane.f32.xlu0 %v717
  %v719 = vpop.xlane.xlu0 %718
  %v720 = vsel %vm694, %v713, 0.0
  %721 = vadd.xlane.f32.xlu0 %v720
  %v722 = vpop.xlane.xlu0 %721
  %v723 = vmul.f32 %v716, %v704
  %v724 = vmul.f32 %v719, %v704
  %v725 = vmul.f32 %v722, %v704
  %v726 = vadd.f32 %v723, 1e-05
  %v727 = vadd.f32 %v724, 1e-05
  %v728 = vadd.f32 %v725, 1e-05
  %v729 = vrsqrt.pop %v726
  %v730 = vmul.f32 %v729, %v726
  %v731 = vmul.f32 %v730, %v729
  %v732 = vmul.f32 0.5, %v731
  %v733 = vsub.f32 1.5, %v732
  %v734 = vmul.f32 %v729, %v733
  %vm735 = vweird.f32 %v726
  %vm736 = vweird.f32 %v729
  %vm737 = vmor %vm735, %vm736
  %v738 = vsel %vm737, %v729, %v734
  %v739 = vrsqrt.pop %v727
  %v740 = vmul.f32 %v739, %v727
  %v741 = vmul.f32 %v740, %v739
  %v742 = vmul.f32 0.5, %v741
  %v743 = vsub.f32 1.5, %v742
  %v744 = vmul.f32 %v739, %v743
  %vm745 = vweird.f32 %v727
  %vm746 = vweird.f32 %v739
  %vm747 = vmor %vm745, %vm746
  %v748 = vsel %vm747, %v739, %v744
  %v749 = vrsqrt.pop %v728
  %v750 = vmul.f32 %v749, %v728
  %v751 = vmul.f32 %v750, %v749
  %v752 = vmul.f32 0.5, %v751
  %v753 = vsub.f32 1.5, %v752
  %v754 = vmul.f32 %v749, %v753
  %vm755 = vweird.f32 %v728
  %vm756 = vweird.f32 %v749
  %vm757 = vmor %vm755, %vm756
  %v758 = vsel %vm757, %v749, %v754
  %v759 = vmul.f32 %v708, %v738
  %v760 = vmul.f32 %v709, %v748
  %v761 = vmul.f32 %v710, %v758
  %v762 = vperm.slane %v131, 2
  %v763 = vmul.f32 %v759, %v762
  %v764 = vmul.f32 %v760, %v762
  %v765 = vmul.f32 %v761, %v762
  %v766 = vperm.slane %v131, 3
  %v767 = vadd.f32 %v763, %v766
  %v768 = vadd.f32 %v764, %v766
  %v769 = vadd.f32 %v765, %v766
  %v770 = vpack.c.bf16 %v768, %v767
  %v771 = vpack.c.bf16 %v769, %v769
  %v772 = vld [vmem:[%s9] sm:$0xf]
  %v773 = vld [vmem:[%s9 + $0x4] sm:$0xf]
  %v774 = vld [vmem:[%s9 + $0x8] sm:$0xf]
  %v775 = vld [vmem:[%s9 + $0xc] sm:$0xf]
  %v776 = vld [vmem:[%s10] sm:$0x1]
  %v778 = vperm.slane %v776, 0
  %v784 = vunpack.c.l.b16 %v772
  %v785 = vunpack.c.l.b16 %v773
  %v786 = vunpack.c.l.b16 %v774
  %v787 = vunpack.c.l.b16 %v775
  %v788 = vpack.c.b16 %v785, %v784
  %v789 = vpack.c.b16 %v787, %v786
  %v793 = vsel %vm154, %v770, 0
  %v796 = vsel %vm154, %v771, 0
  %798 = vmatpush.bf16.msra.mxu0 0
  %799 = vmatpush.bf16.msra.mxu0 0
  %800 = vmatpush.bf16.msra.mxu0 0
  %801 = vmatpush.bf16.msra.mxu0 0
  %802 = vmatpush.bf16.msra.mxu0 0
  %803 = vmatpush.bf16.msra.mxu0 0
  %804 = vmatpush.bf16.msra.mxu0 %v789
  %805 = vmatpush.bf16.msra.mxu0 %v788
  %806 = vmatmul.bf16.gmra.mxu0 %v793
  %v807 = vpop.f32.mrf.mxu0
  %v808 = vadd.f32 %v778, %v807
  %v809 = vpop.f32.mrf.mxu0
  %v810 = vadd.f32 %v778, %v809
  %811 = vmatmul.bf16.gmra.mxu0 %v796
  %v812 = vpop.f32.mrf.mxu0
  %v813 = vadd.f32 %v778, %v812
  %v814 = vpop.f32.mrf.mxu0
  %815 = vdwg.mxu0
  %v816 = vmax.f32 %v808, 0.0
  %v817 = vmax.f32 %v810, 0.0
  %v818 = vmax.f32 %v813, 0.0
  %v819 = vpack.c.bf16 %v817, %v816
  %v820 = vpack.c.bf16 %v818, %v818
  %v821 = vld [vmem:[%s11] sm:$0xf]
  %v822 = vld [vmem:[%s11 + $0x4] sm:$0xf]
  %v823 = vld [vmem:[%s11 + $0x8] sm:$0xf]
  %v824 = vld [vmem:[%s11 + $0xc] sm:$0xf]
  %v825 = vld [vmem:[%s11 + $0x10] sm:$0xf]
  %v826 = vld [vmem:[%s11 + $0x14] sm:$0xf]
  %v827 = vld [vmem:[%s11 + $0x18] sm:$0xf]
  %v828 = vld [vmem:[%s11 + $0x1c] sm:$0xf]
  %v829 = vperm.slane %v131, 1
  %v838 = vunpack.c.l.b16 %v821
  %v839 = vunpack.c.l.b16 %v822
  %v840 = vunpack.c.l.b16 %v823
  %v841 = vunpack.c.l.b16 %v824
  %v842 = vunpack.c.l.b16 %v825
  %v843 = vunpack.c.l.b16 %v826
  %v844 = vunpack.c.l.b16 %v827
  %v845 = vunpack.c.l.b16 %v828
  %v846 = vpack.c.b16 %v839, %v838
  %v847 = vpack.c.b16 %v841, %v840
  %v848 = vpack.c.b16 %v843, %v842
  %v849 = vpack.c.b16 %v845, %v844
  %vm854 = vcmask 523264
  %v856 = vsel %vm854, %v819, 0
  %v859 = vsel %vm854, %v820, 0
  %861 = vmatpush.bf16.msra.mxu0 0
  %862 = vmatpush.bf16.msra.mxu0 0
  %863 = vmatpush.bf16.msra.mxu0 0
  %864 = vmatpush.bf16.msra.mxu0 0
  %865 = vmatpush.bf16.msra.mxu0 %v849
  %866 = vmatpush.bf16.msra.mxu0 %v848
  %867 = vmatpush.bf16.msra.mxu0 %v847
  %868 = vmatpush.bf16.msra.mxu0 %v846
  %869 = vmatmul.bf16.gmra.mxu0 %v856
  %v870 = vpop.f32.mrf.mxu0
  %v871 = vadd.f32 %v829, %v870
  %v872 = vpop.f32.mrf.mxu0
  %v873 = vadd.f32 %v829, %v872
  %874 = vmatmul.bf16.gmra.mxu0 %v859
  %v875 = vpop.f32.mrf.mxu0
  %v876 = vadd.f32 %v829, %v875
  %v877 = vpop.f32.mrf.mxu0
  %878 = vdwg.mxu0
  %v879 = vadd.f32 %v767, %v871
  %v880 = vadd.f32 %v768, %v873
  %v881 = vadd.f32 %v769, %v876
  %v882 = vsel %vm154, %v879, 0.0
  %883 = vadd.xlane.f32.xlu0 %v882
  %v884 = vpop.xlane.xlu0 %883
  %v885 = vsel %vm154, %v880, 0.0
  %886 = vadd.xlane.f32.xlu0 %v885
  %v887 = vpop.xlane.xlu0 %886
  %v888 = vsel %vm694, %v881, 0.0
  %889 = vadd.xlane.f32.xlu0 %v888
  %v890 = vpop.xlane.xlu0 %889
  %v891 = vmul.f32 %v884, %v704
  %v892 = vmul.f32 %v887, %v704
  %v893 = vmul.f32 %v890, %v704
  %v894 = vsub.f32 %v879, %v891
  %v895 = vsub.f32 %v880, %v892
  %v896 = vsub.f32 %v881, %v893
  %v897 = vmul.f32 %v894, %v894
  %v898 = vmul.f32 %v895, %v895
  %v899 = vmul.f32 %v896, %v896
  %v900 = vsel %vm154, %v897, 0.0
  %901 = vadd.xlane.f32.xlu0 %v900
  %v902 = vpop.xlane.xlu0 %901
  %v903 = vsel %vm154, %v898, 0.0
  %904 = vadd.xlane.f32.xlu0 %v903
  %v905 = vpop.xlane.xlu0 %904
  %v906 = vsel %vm694, %v899, 0.0
  %907 = vadd.xlane.f32.xlu0 %v906
  %v908 = vpop.xlane.xlu0 %907
  %v909 = vmul.f32 %v902, %v704
  %v910 = vmul.f32 %v905, %v704
  %v911 = vmul.f32 %v908, %v704
  %v912 = vadd.f32 %v909, 1e-05
  %v913 = vadd.f32 %v910, 1e-05
  %v914 = vadd.f32 %v911, 1e-05
  %v915 = vrsqrt.pop %v912
  %v916 = vmul.f32 %v915, %v912
  %v917 = vmul.f32 %v916, %v915
  %v918 = vmul.f32 0.5, %v917
  %v919 = vsub.f32 1.5, %v918
  %v920 = vmul.f32 %v915, %v919
  %vm921 = vweird.f32 %v912
  %vm922 = vweird.f32 %v915
  %vm923 = vmor %vm921, %vm922
  %v924 = vsel %vm923, %v915, %v920
  %v925 = vrsqrt.pop %v913
  %v926 = vmul.f32 %v925, %v913
  %v927 = vmul.f32 %v926, %v925
  %v928 = vmul.f32 0.5, %v927
  %v929 = vsub.f32 1.5, %v928
  %v930 = vmul.f32 %v925, %v929
  %vm931 = vweird.f32 %v913
  %vm932 = vweird.f32 %v925
  %vm933 = vmor %vm931, %vm932
  %v934 = vsel %vm933, %v925, %v930
  %v935 = vrsqrt.pop %v914
  %v936 = vmul.f32 %v935, %v914
  %v937 = vmul.f32 %v936, %v935
  %v938 = vmul.f32 0.5, %v937
  %v939 = vsub.f32 1.5, %v938
  %v940 = vmul.f32 %v935, %v939
  %vm941 = vweird.f32 %v914
  %vm942 = vweird.f32 %v935
  %vm943 = vmor %vm941, %vm942
  %v944 = vsel %vm943, %v935, %v940
  %v945 = vmul.f32 %v894, %v924
  %v946 = vmul.f32 %v895, %v934
  %v947 = vmul.f32 %v896, %v944
  %v948 = vperm.slane %v131, 4
  %v949 = vmul.f32 %v945, %v948
  %v950 = vmul.f32 %v946, %v948
  %v951 = vmul.f32 %v947, %v948
  %v952 = vperm.slane %v131, 5
  %v953 = vadd.f32 %v949, %v952
  %v954 = vadd.f32 %v950, %v952
  %v955 = vadd.f32 %v951, %v952
  %s956 = scalar_lea.vmem %s12, 8
  %v957 = vld [vmem:[%s956] sm:$0x3f]
  %v958 = vpack.c.bf16 %v954, %v953
  %v959 = vpack.c.bf16 %v955, %v955
  %s960 = scalar_lea.vmem %s6, 16
  %v961 = vld [vmem:[%s960] sm:$0xf]
  %v962 = vld [vmem:[%s960 + $0x4] sm:$0xf]
  %v963 = vld [vmem:[%s960 + $0x8] sm:$0xf]
  %v964 = vld [vmem:[%s960 + $0xc] sm:$0xf]
  %s965 = scalar_lea.vmem %s7, 1
  %v966 = vld [vmem:[%s965] sm:$0x1]
  %v968 = vperm.slane %v966, 0
  %v974 = vunpack.c.l.b16 %v961
  %v975 = vunpack.c.l.b16 %v962
  %v976 = vunpack.c.l.b16 %v963
  %v977 = vunpack.c.l.b16 %v964
  %v978 = vpack.c.b16 %v975, %v974
  %v979 = vpack.c.b16 %v977, %v976
  %v983 = vsel %vm154, %v958, 0
  %v986 = vsel %vm154, %v959, 0
  %988 = vmatpush.bf16.msra.mxu0 0
  %989 = vmatpush.bf16.msra.mxu0 0
  %990 = vmatpush.bf16.msra.mxu0 0
  %991 = vmatpush.bf16.msra.mxu0 0
  %992 = vmatpush.bf16.msra.mxu0 0
  %993 = vmatpush.bf16.msra.mxu0 0
  %994 = vmatpush.bf16.msra.mxu0 %v979
  %995 = vmatpush.bf16.msra.mxu0 %v978
  %996 = vmatmul.bf16.gmra.mxu0 %v983
  %v997 = vpop.f32.mrf.mxu0
  %v998 = vadd.f32 %v968, %v997
  %v999 = vpop.f32.mrf.mxu0
  %v1000 = vadd.f32 %v968, %v999
  %1001 = vmatmul.bf16.gmra.mxu0 %v986
  %v1002 = vpop.f32.mrf.mxu0
  %v1003 = vadd.f32 %v968, %v1002
  %v1004 = vpop.f32.mrf.mxu0
  %1005 = vdwg.mxu0
  %v1006 = vpack.c.bf16 %v1000, %v998
  %v1007 = vpack.c.bf16 %v1003, %v1003
  %v1008 = vmul.f32 %v998, %v77
  %v1009 = vmul.f32 %v1000, %v77
  %v1010 = vmul.f32 %v1003, %v77
  %v1011 = vpack.c.bf16 %v1009, %v1008
  %v1012 = vpack.c.bf16 %v1010, %v1010
  %1015 = vrot.lane.b32.xlu0 %v1006, 96
  %v1016 = vpop.permute.xlu0 %1015
  %1017 = vrot.lane.b32.xlu0 %v1007, 96
  %v1018 = vpop.permute.xlu0 %1017
  %v1020 = vsel %vm154, %v1011, 0
  %v1023 = vsel %vm154, %v1012, 0
  %v1026 = vsel %vm154, %v1016, 0
  %v1029 = vsel %vm154, %v1018, 0
  %1031 = vmatpush.bf16.xpose.msra.mxu0 0
  %1032 = vmatpush.bf16.xpose.msra.mxu0 0
  %1033 = vmatpush.bf16.xpose.msra.mxu0 0
  %1034 = vmatpush.bf16.xpose.msra.mxu0 0
  %1035 = vmatpush.bf16.xpose.msra.mxu0 0
  %1036 = vmatpush.bf16.xpose.msra.mxu0 0
  %1037 = vmatpush.bf16.xpose.msra.mxu0 %v1029
  %1038 = vmatpush.bf16.xpose.msra.mxu0 %v1026
  %1039 = vmatmul.bf16.gmra.mxu0 %v1020
  %v1040 = vpop.f32.mrf.mxu0
  %v1041 = vadd.f32 0.0, %v1040
  %v1042 = vpop.f32.mrf.mxu0
  %v1043 = vadd.f32 0.0, %v1042
  %1044 = vmatmul.bf16.gmra.mxu0 %v1023
  %v1045 = vpop.f32.mrf.mxu0
  %v1046 = vadd.f32 0.0, %v1045
  %v1047 = vpop.f32.mrf.mxu0
  %1048 = vdwg.mxu0
  %v1049 = vsel %vm68, %v1041, -1e+09
  %v1050 = vsel %vm69, %v1043, -1e+09
  %v1051 = vsel %vm70, %v1046, -1e+09
  %v1052 = vsel %vm225, %v1049, -inf
  %1053 = vmax.xlane.f32.xlu0 %v1052
  %v1054 = vpop.xlane.xlu0 %1053
  %v1055 = vsel %vm225, %v1050, -inf
  %1056 = vmax.xlane.f32.xlu0 %v1055
  %v1057 = vpop.xlane.xlu0 %1056
  %v1058 = vsel %vm232, %v1051, -inf
  %1059 = vmax.xlane.f32.xlu0 %v1058
  %v1060 = vpop.xlane.xlu0 %1059
  %v1061 = vsub.f32 %v1049, %v1054
  %v1062 = vsub.f32 %v1050, %v1057
  %v1063 = vsub.f32 %v1051, %v1060
  %v1064 = vmul.f32 %v1061, 1.442695
  %v1065 = vpow.pop %v1064
  %v1066 = vmul.f32 %v1062, 1.442695
  %v1067 = vpow.pop %v1066
  %v1068 = vmul.f32 %v1063, 1.442695
  %v1069 = vpow.pop %v1068
  %v1070 = vsel %vm225, %v1065, 0.0
  %1071 = vadd.xlane.f32.xlu0 %v1070
  %v1072 = vpop.xlane.xlu0 %1071
  %v1073 = vsel %vm225, %v1067, 0.0
  %1074 = vadd.xlane.f32.xlu0 %v1073
  %v1075 = vpop.xlane.xlu0 %1074
  %v1076 = vsel %vm232, %v1069, 0.0
  %1077 = vadd.xlane.f32.xlu0 %v1076
  %v1078 = vpop.xlane.xlu0 %1077
  %v1079 = vrcp.pop %v1072
  %v1080 = vrcp.pop %v1075
  %v1081 = vrcp.pop %v1078
  %v1082 = vmul.f32 %v1065, %v1079
  %v1083 = vmul.f32 %v1067, %v1080
  %v1084 = vmul.f32 %v1069, %v1081
  %v1085 = vpack.c.bf16 %v1083, %v1082
  %v1086 = vpack.c.bf16 %v1084, %v1084
  %v1087 = vmul.f32 %v998, %v264
  %v1088 = vmul.f32 %v1000, %v264
  %v1089 = vmul.f32 %v1003, %v264
  %v1090 = vpack.c.bf16 %v1088, %v1087
  %v1091 = vpack.c.bf16 %v1089, %v1089
  %v1092 = vmul.f32 %v998, %v82
  %v1093 = vmul.f32 %v1000, %v82
  %v1094 = vmul.f32 %v1003, %v82
  %v1095 = vpack.c.bf16 %v1093, %v1092
  %v1096 = vpack.c.bf16 %v1094, %v1094
  %v1098 = vsel %vm154, %v1095, 0
  %v1101 = vsel %vm154, %v1096, 0
  %1103 = vmatpush.bf16.xpose.msra.mxu0 0
  %1104 = vmatpush.bf16.xpose.msra.mxu0 0
  %1105 = vmatpush.bf16.xpose.msra.mxu0 0
  %1106 = vmatpush.bf16.xpose.msra.mxu0 0
  %1107 = vmatpush.bf16.xpose.msra.mxu0 0
  %1108 = vmatpush.bf16.xpose.msra.mxu0 0
  %1109 = vmatpush.bf16.xpose.msra.mxu0 %v1029
  %1110 = vmatpush.bf16.xpose.msra.mxu0 %v1026
  %1111 = vmatmul.bf16.gmra.mxu0 %v1098
  %v1112 = vpop.f32.mrf.mxu0
  %v1113 = vadd.f32 0.0, %v1112
  %v1114 = vpop.f32.mrf.mxu0
  %v1115 = vadd.f32 0.0, %v1114
  %1116 = vmatmul.bf16.gmra.mxu0 %v1101
  %v1117 = vpop.f32.mrf.mxu0
  %v1118 = vadd.f32 0.0, %v1117
  %v1119 = vpop.f32.mrf.mxu0
  %1120 = vdwg.mxu0
  %v1121 = vsel %vm68, %v1113, -1e+09
  %v1122 = vsel %vm69, %v1115, -1e+09
  %v1123 = vsel %vm70, %v1118, -1e+09
  %v1124 = vsel %vm225, %v1121, -inf
  %1125 = vmax.xlane.f32.xlu0 %v1124
  %v1126 = vpop.xlane.xlu0 %1125
  %v1127 = vsel %vm225, %v1122, -inf
  %1128 = vmax.xlane.f32.xlu0 %v1127
  %v1129 = vpop.xlane.xlu0 %1128
  %v1130 = vsel %vm232, %v1123, -inf
  %1131 = vmax.xlane.f32.xlu0 %v1130
  %v1132 = vpop.xlane.xlu0 %1131
  %v1133 = vsub.f32 %v1121, %v1126
  %v1134 = vsub.f32 %v1122, %v1129
  %v1135 = vsub.f32 %v1123, %v1132
  %v1136 = vmul.f32 %v1133, 1.442695
  %v1137 = vpow.pop %v1136
  %v1138 = vmul.f32 %v1134, 1.442695
  %v1139 = vpow.pop %v1138
  %v1140 = vmul.f32 %v1135, 1.442695
  %v1141 = vpow.pop %v1140
  %v1142 = vsel %vm225, %v1137, 0.0
  %1143 = vadd.xlane.f32.xlu0 %v1142
  %v1144 = vpop.xlane.xlu0 %1143
  %v1145 = vsel %vm225, %v1139, 0.0
  %1146 = vadd.xlane.f32.xlu0 %v1145
  %v1147 = vpop.xlane.xlu0 %1146
  %v1148 = vsel %vm232, %v1141, 0.0
  %1149 = vadd.xlane.f32.xlu0 %v1148
  %v1150 = vpop.xlane.xlu0 %1149
  %v1151 = vrcp.pop %v1144
  %v1152 = vrcp.pop %v1147
  %v1153 = vrcp.pop %v1150
  %v1154 = vmul.f32 %v1137, %v1151
  %v1155 = vmul.f32 %v1139, %v1152
  %v1156 = vmul.f32 %v1141, %v1153
  %v1157 = vpack.c.bf16 %v1155, %v1154
  %v1158 = vpack.c.bf16 %v1156, %v1156
  %v1159 = vmul.f32 %v998, %v340
  %v1160 = vmul.f32 %v1000, %v340
  %v1161 = vmul.f32 %v1003, %v340
  %v1162 = vpack.c.bf16 %v1160, %v1159
  %v1163 = vpack.c.bf16 %v1161, %v1161
  %1166 = vrot.lane.b32.xlu0 %v1162, 64
  %v1167 = vpop.permute.xlu0 %1166
  %1168 = vrot.lane.b32.xlu0 %v1163, 64
  %v1169 = vpop.permute.xlu0 %1168
  %v1172 = vsel %vm225, %v1157, 0
  %v1175 = vsel %vm225, %v1158, 0
  %v1178 = vsel %vm360, %v1169, 0
  %1180 = vmatpush.bf16.msra.mxu0 0
  %1181 = vmatpush.bf16.msra.mxu0 0
  %1182 = vmatpush.bf16.msra.mxu0 0
  %1183 = vmatpush.bf16.msra.mxu0 0
  %1184 = vmatpush.bf16.msra.mxu0 0
  %1185 = vmatpush.bf16.msra.mxu0 0
  %1186 = vmatpush.bf16.msra.mxu0 %v1178
  %1187 = vmatpush.bf16.msra.mxu0 %v1167
  %1188 = vmatmul.bf16.gmra.mxu0 %v1172
  %v1189 = vpop.f32.mrf.mxu0
  %v1190 = vadd.f32 0.0, %v1189
  %v1191 = vpop.f32.mrf.mxu0
  %v1192 = vadd.f32 0.0, %v1191
  %1193 = vmatmul.bf16.gmra.mxu0 %v1175
  %v1194 = vpop.f32.mrf.mxu0
  %v1195 = vadd.f32 0.0, %v1194
  %v1196 = vpop.f32.mrf.mxu0
  %1197 = vdwg.mxu0
  %1200 = vrot.lane.b32.xlu0 %v1090, 64
  %v1201 = vpop.permute.xlu0 %1200
  %1202 = vrot.lane.b32.xlu0 %v1091, 64
  %v1203 = vpop.permute.xlu0 %1202
  %v1206 = vsel %vm225, %v1085, 0
  %v1209 = vsel %vm225, %v1086, 0
  %v1212 = vsel %vm360, %v1203, 0
  %1214 = vmatpush.bf16.msra.mxu0 0
  %1215 = vmatpush.bf16.msra.mxu0 0
  %1216 = vmatpush.bf16.msra.mxu0 0
  %1217 = vmatpush.bf16.msra.mxu0 0
  %1218 = vmatpush.bf16.msra.mxu0 0
  %1219 = vmatpush.bf16.msra.mxu0 0
  %1220 = vmatpush.bf16.msra.mxu0 %v1212
  %1221 = vmatpush.bf16.msra.mxu0 %v1201
  %1222 = vmatmul.bf16.gmra.mxu0 %v1206
  %v1223 = vpop.f32.mrf.mxu0
  %v1224 = vadd.f32 %v1190, %v1223
  %v1225 = vpop.f32.mrf.mxu0
  %v1226 = vadd.f32 %v1192, %v1225
  %1227 = vmatmul.bf16.gmra.mxu0 %v1209
  %v1228 = vpop.f32.mrf.mxu0
  %v1229 = vadd.f32 %v1195, %v1228
  %v1230 = vpop.f32.mrf.mxu0
  %1231 = vdwg.mxu0
  %v1232 = vmul.f32 %v998, %v87
  %v1233 = vmul.f32 %v1000, %v87
  %v1234 = vmul.f32 %v1003, %v87
  %v1235 = vpack.c.bf16 %v1233, %v1232
  %v1236 = vpack.c.bf16 %v1234, %v1234
  %v1238 = vsel %vm154, %v1235, 0
  %v1241 = vsel %vm154, %v1236, 0
  %1243 = vmatpush.bf16.xpose.msra.mxu0 0
  %1244 = vmatpush.bf16.xpose.msra.mxu0 0
  %1245 = vmatpush.bf16.xpose.msra.mxu0 0
  %1246 = vmatpush.bf16.xpose.msra.mxu0 0
  %1247 = vmatpush.bf16.xpose.msra.mxu0 0
  %1248 = vmatpush.bf16.xpose.msra.mxu0 0
  %1249 = vmatpush.bf16.xpose.msra.mxu0 %v1029
  %1250 = vmatpush.bf16.xpose.msra.mxu0 %v1026
  %1251 = vmatmul.bf16.gmra.mxu0 %v1238
  %v1252 = vpop.f32.mrf.mxu0
  %v1253 = vadd.f32 0.0, %v1252
  %v1254 = vpop.f32.mrf.mxu0
  %v1255 = vadd.f32 0.0, %v1254
  %1256 = vmatmul.bf16.gmra.mxu0 %v1241
  %v1257 = vpop.f32.mrf.mxu0
  %v1258 = vadd.f32 0.0, %v1257
  %v1259 = vpop.f32.mrf.mxu0
  %1260 = vdwg.mxu0
  %v1261 = vsel %vm68, %v1253, -1e+09
  %v1262 = vsel %vm69, %v1255, -1e+09
  %v1263 = vsel %vm70, %v1258, -1e+09
  %v1264 = vsel %vm225, %v1261, -inf
  %1265 = vmax.xlane.f32.xlu0 %v1264
  %v1266 = vpop.xlane.xlu0 %1265
  %v1267 = vsel %vm225, %v1262, -inf
  %1268 = vmax.xlane.f32.xlu0 %v1267
  %v1269 = vpop.xlane.xlu0 %1268
  %v1270 = vsel %vm232, %v1263, -inf
  %1271 = vmax.xlane.f32.xlu0 %v1270
  %v1272 = vpop.xlane.xlu0 %1271
  %v1273 = vsub.f32 %v1261, %v1266
  %v1274 = vsub.f32 %v1262, %v1269
  %v1275 = vsub.f32 %v1263, %v1272
  %v1276 = vmul.f32 %v1273, 1.442695
  %v1277 = vpow.pop %v1276
  %v1278 = vmul.f32 %v1274, 1.442695
  %v1279 = vpow.pop %v1278
  %v1280 = vmul.f32 %v1275, 1.442695
  %v1281 = vpow.pop %v1280
  %v1282 = vsel %vm225, %v1277, 0.0
  %1283 = vadd.xlane.f32.xlu0 %v1282
  %v1284 = vpop.xlane.xlu0 %1283
  %v1285 = vsel %vm225, %v1279, 0.0
  %1286 = vadd.xlane.f32.xlu0 %v1285
  %v1287 = vpop.xlane.xlu0 %1286
  %v1288 = vsel %vm232, %v1281, 0.0
  %1289 = vadd.xlane.f32.xlu0 %v1288
  %v1290 = vpop.xlane.xlu0 %1289
  %v1291 = vrcp.pop %v1284
  %v1292 = vrcp.pop %v1287
  %v1293 = vrcp.pop %v1290
  %v1294 = vmul.f32 %v1277, %v1291
  %v1295 = vmul.f32 %v1279, %v1292
  %v1296 = vmul.f32 %v1281, %v1293
  %v1297 = vpack.c.bf16 %v1295, %v1294
  %v1298 = vpack.c.bf16 %v1296, %v1296
  %v1299 = vmul.f32 %v998, %v485
  %v1300 = vmul.f32 %v1000, %v485
  %v1301 = vmul.f32 %v1003, %v485
  %v1302 = vpack.c.bf16 %v1300, %v1299
  %v1303 = vpack.c.bf16 %v1301, %v1301
  %1306 = vrot.lane.b32.xlu0 %v1302, 64
  %v1307 = vpop.permute.xlu0 %1306
  %1308 = vrot.lane.b32.xlu0 %v1303, 64
  %v1309 = vpop.permute.xlu0 %1308
  %v1312 = vsel %vm225, %v1297, 0
  %v1315 = vsel %vm225, %v1298, 0
  %v1318 = vsel %vm360, %v1309, 0
  %1320 = vmatpush.bf16.msra.mxu0 0
  %1321 = vmatpush.bf16.msra.mxu0 0
  %1322 = vmatpush.bf16.msra.mxu0 0
  %1323 = vmatpush.bf16.msra.mxu0 0
  %1324 = vmatpush.bf16.msra.mxu0 0
  %1325 = vmatpush.bf16.msra.mxu0 0
  %1326 = vmatpush.bf16.msra.mxu0 %v1318
  %1327 = vmatpush.bf16.msra.mxu0 %v1307
  %1328 = vmatmul.bf16.gmra.mxu0 %v1312
  %v1329 = vpop.f32.mrf.mxu0
  %v1330 = vadd.f32 0.0, %v1329
  %v1331 = vpop.f32.mrf.mxu0
  %v1332 = vadd.f32 0.0, %v1331
  %1333 = vmatmul.bf16.gmra.mxu0 %v1315
  %v1334 = vpop.f32.mrf.mxu0
  %v1335 = vadd.f32 0.0, %v1334
  %v1336 = vpop.f32.mrf.mxu0
  %1337 = vdwg.mxu0
  %v1338 = vadd.f32 %v1224, %v1330
  %v1339 = vadd.f32 %v1226, %v1332
  %v1340 = vadd.f32 %v1229, %v1335
  %v1341 = vmul.f32 %v998, %v92
  %v1342 = vmul.f32 %v1000, %v92
  %v1343 = vmul.f32 %v1003, %v92
  %v1344 = vpack.c.bf16 %v1342, %v1341
  %v1345 = vpack.c.bf16 %v1343, %v1343
  %v1347 = vsel %vm154, %v1344, 0
  %v1350 = vsel %vm154, %v1345, 0
  %1352 = vmatpush.bf16.xpose.msra.mxu0 0
  %1353 = vmatpush.bf16.xpose.msra.mxu0 0
  %1354 = vmatpush.bf16.xpose.msra.mxu0 0
  %1355 = vmatpush.bf16.xpose.msra.mxu0 0
  %1356 = vmatpush.bf16.xpose.msra.mxu0 0
  %1357 = vmatpush.bf16.xpose.msra.mxu0 0
  %1358 = vmatpush.bf16.xpose.msra.mxu0 %v1029
  %1359 = vmatpush.bf16.xpose.msra.mxu0 %v1026
  %1360 = vmatmul.bf16.gmra.mxu0 %v1347
  %v1361 = vpop.f32.mrf.mxu0
  %v1362 = vadd.f32 0.0, %v1361
  %v1363 = vpop.f32.mrf.mxu0
  %v1364 = vadd.f32 0.0, %v1363
  %1365 = vmatmul.bf16.gmra.mxu0 %v1350
  %v1366 = vpop.f32.mrf.mxu0
  %v1367 = vadd.f32 0.0, %v1366
  %v1368 = vpop.f32.mrf.mxu0
  %1369 = vdwg.mxu0
  %v1370 = vsel %vm68, %v1362, -1e+09
  %v1371 = vsel %vm69, %v1364, -1e+09
  %v1372 = vsel %vm70, %v1367, -1e+09
  %v1373 = vsel %vm225, %v1370, -inf
  %1374 = vmax.xlane.f32.xlu0 %v1373
  %v1375 = vpop.xlane.xlu0 %1374
  %v1376 = vsel %vm225, %v1371, -inf
  %1377 = vmax.xlane.f32.xlu0 %v1376
  %v1378 = vpop.xlane.xlu0 %1377
  %v1379 = vsel %vm232, %v1372, -inf
  %1380 = vmax.xlane.f32.xlu0 %v1379
  %v1381 = vpop.xlane.xlu0 %1380
  %v1382 = vsub.f32 %v1370, %v1375
  %v1383 = vsub.f32 %v1371, %v1378
  %v1384 = vsub.f32 %v1372, %v1381
  %v1385 = vmul.f32 %v1382, 1.442695
  %v1386 = vpow.pop %v1385
  %v1387 = vmul.f32 %v1383, 1.442695
  %v1388 = vpow.pop %v1387
  %v1389 = vmul.f32 %v1384, 1.442695
  %v1390 = vpow.pop %v1389
  %v1391 = vsel %vm225, %v1386, 0.0
  %1392 = vadd.xlane.f32.xlu0 %v1391
  %v1393 = vpop.xlane.xlu0 %1392
  %v1394 = vsel %vm225, %v1388, 0.0
  %1395 = vadd.xlane.f32.xlu0 %v1394
  %v1396 = vpop.xlane.xlu0 %1395
  %v1397 = vsel %vm232, %v1390, 0.0
  %1398 = vadd.xlane.f32.xlu0 %v1397
  %v1399 = vpop.xlane.xlu0 %1398
  %v1400 = vrcp.pop %v1393
  %v1401 = vrcp.pop %v1396
  %v1402 = vrcp.pop %v1399
  %v1403 = vmul.f32 %v1386, %v1400
  %v1404 = vmul.f32 %v1388, %v1401
  %v1405 = vmul.f32 %v1390, %v1402
  %v1406 = vpack.c.bf16 %v1404, %v1403
  %v1407 = vpack.c.bf16 %v1405, %v1405
  %v1408 = vmul.f32 %v998, %v598
  %v1409 = vmul.f32 %v1000, %v598
  %v1410 = vmul.f32 %v1003, %v598
  %v1411 = vpack.c.bf16 %v1409, %v1408
  %v1412 = vpack.c.bf16 %v1410, %v1410
  %1415 = vrot.lane.b32.xlu0 %v1411, 64
  %v1416 = vpop.permute.xlu0 %1415
  %1417 = vrot.lane.b32.xlu0 %v1412, 64
  %v1418 = vpop.permute.xlu0 %1417
  %v1421 = vsel %vm225, %v1406, 0
  %v1424 = vsel %vm225, %v1407, 0
  %v1427 = vsel %vm360, %v1418, 0
  %1429 = vmatpush.bf16.msra.mxu0 0
  %1430 = vmatpush.bf16.msra.mxu0 0
  %1431 = vmatpush.bf16.msra.mxu0 0
  %1432 = vmatpush.bf16.msra.mxu0 0
  %1433 = vmatpush.bf16.msra.mxu0 0
  %1434 = vmatpush.bf16.msra.mxu0 0
  %1435 = vmatpush.bf16.msra.mxu0 %v1427
  %1436 = vmatpush.bf16.msra.mxu0 %v1416
  %1437 = vmatmul.bf16.gmra.mxu0 %v1421
  %v1438 = vpop.f32.mrf.mxu0
  %v1439 = vadd.f32 0.0, %v1438
  %v1440 = vpop.f32.mrf.mxu0
  %v1441 = vadd.f32 0.0, %v1440
  %1442 = vmatmul.bf16.gmra.mxu0 %v1424
  %v1443 = vpop.f32.mrf.mxu0
  %v1444 = vadd.f32 0.0, %v1443
  %v1445 = vpop.f32.mrf.mxu0
  %1446 = vdwg.mxu0
  %v1447 = vadd.f32 %v1338, %v1439
  %v1448 = vadd.f32 %v1339, %v1441
  %v1449 = vadd.f32 %v1340, %v1444
  %v1450 = vpack.c.bf16 %v1448, %v1447
  %v1451 = vpack.c.bf16 %v1449, %v1449
  %s1452 = scalar_lea.vmem %s8, 16
  %v1453 = vld [vmem:[%s1452] sm:$0xf]
  %v1454 = vld [vmem:[%s1452 + $0x4] sm:$0xf]
  %v1455 = vld [vmem:[%s1452 + $0x8] sm:$0xf]
  %v1456 = vld [vmem:[%s1452 + $0xc] sm:$0xf]
  %v1457 = vperm.slane %v957, 0
  %v1462 = vunpack.c.l.b16 %v1453
  %v1463 = vunpack.c.l.b16 %v1454
  %v1464 = vunpack.c.l.b16 %v1455
  %v1465 = vunpack.c.l.b16 %v1456
  %v1466 = vpack.c.b16 %v1463, %v1462
  %v1467 = vpack.c.b16 %v1465, %v1464
  %v1471 = vsel %vm154, %v1450, 0
  %v1474 = vsel %vm154, %v1451, 0
  %1476 = vmatpush.bf16.msra.mxu0 0
  %1477 = vmatpush.bf16.msra.mxu0 0
  %1478 = vmatpush.bf16.msra.mxu0 0
  %1479 = vmatpush.bf16.msra.mxu0 0
  %1480 = vmatpush.bf16.msra.mxu0 0
  %1481 = vmatpush.bf16.msra.mxu0 0
  %1482 = vmatpush.bf16.msra.mxu0 %v1467
  %1483 = vmatpush.bf16.msra.mxu0 %v1466
  %1484 = vmatmul.bf16.gmra.mxu0 %v1471
  %v1485 = vpop.f32.mrf.mxu0
  %v1486 = vadd.f32 %v1457, %v1485
  %v1487 = vpop.f32.mrf.mxu0
  %v1488 = vadd.f32 %v1457, %v1487
  %1489 = vmatmul.bf16.gmra.mxu0 %v1474
  %v1490 = vpop.f32.mrf.mxu0
  %v1491 = vadd.f32 %v1457, %v1490
  %v1492 = vpop.f32.mrf.mxu0
  %1493 = vdwg.mxu0
  %v1494 = vadd.f32 %v953, %v1486
  %v1495 = vadd.f32 %v954, %v1488
  %v1496 = vadd.f32 %v955, %v1491
  %v1497 = vsel %vm154, %v1494, 0.0
  %1498 = vadd.xlane.f32.xlu0 %v1497
  %v1499 = vpop.xlane.xlu0 %1498
  %v1500 = vsel %vm154, %v1495, 0.0
  %1501 = vadd.xlane.f32.xlu0 %v1500
  %v1502 = vpop.xlane.xlu0 %1501
  %v1503 = vsel %vm694, %v1496, 0.0
  %1504 = vadd.xlane.f32.xlu0 %v1503
  %v1505 = vpop.xlane.xlu0 %1504
  %v1506 = vmul.f32 %v1499, %v704
  %v1507 = vmul.f32 %v1502, %v704
  %v1508 = vmul.f32 %v1505, %v704
  %v1509 = vsub.f32 %v1494, %v1506
  %v1510 = vsub.f32 %v1495, %v1507
  %v1511 = vsub.f32 %v1496, %v1508
  %v1512 = vmul.f32 %v1509, %v1509
  %v1513 = vmul.f32 %v1510, %v1510
  %v1514 = vmul.f32 %v1511, %v1511
  %v1515 = vsel %vm154, %v1512, 0.0
  %1516 = vadd.xlane.f32.xlu0 %v1515
  %v1517 = vpop.xlane.xlu0 %1516
  %v1518 = vsel %vm154, %v1513, 0.0
  %1519 = vadd.xlane.f32.xlu0 %v1518
  %v1520 = vpop.xlane.xlu0 %1519
  %v1521 = vsel %vm694, %v1514, 0.0
  %1522 = vadd.xlane.f32.xlu0 %v1521
  %v1523 = vpop.xlane.xlu0 %1522
  %v1524 = vmul.f32 %v1517, %v704
  %v1525 = vmul.f32 %v1520, %v704
  %v1526 = vmul.f32 %v1523, %v704
  %v1527 = vadd.f32 %v1524, 1e-05
  %v1528 = vadd.f32 %v1525, 1e-05
  %v1529 = vadd.f32 %v1526, 1e-05
  %v1530 = vrsqrt.pop %v1527
  %v1531 = vmul.f32 %v1530, %v1527
  %v1532 = vmul.f32 %v1531, %v1530
  %v1533 = vmul.f32 0.5, %v1532
  %v1534 = vsub.f32 1.5, %v1533
  %v1535 = vmul.f32 %v1530, %v1534
  %vm1536 = vweird.f32 %v1527
  %vm1537 = vweird.f32 %v1530
  %vm1538 = vmor %vm1536, %vm1537
  %v1539 = vsel %vm1538, %v1530, %v1535
  %v1540 = vrsqrt.pop %v1528
  %v1541 = vmul.f32 %v1540, %v1528
  %v1542 = vmul.f32 %v1541, %v1540
  %v1543 = vmul.f32 0.5, %v1542
  %v1544 = vsub.f32 1.5, %v1543
  %v1545 = vmul.f32 %v1540, %v1544
  %vm1546 = vweird.f32 %v1528
  %vm1547 = vweird.f32 %v1540
  %vm1548 = vmor %vm1546, %vm1547
  %v1549 = vsel %vm1548, %v1540, %v1545
  %v1550 = vrsqrt.pop %v1529
  %v1551 = vmul.f32 %v1550, %v1529
  %v1552 = vmul.f32 %v1551, %v1550
  %v1553 = vmul.f32 0.5, %v1552
  %v1554 = vsub.f32 1.5, %v1553
  %v1555 = vmul.f32 %v1550, %v1554
  %vm1556 = vweird.f32 %v1529
  %vm1557 = vweird.f32 %v1550
  %vm1558 = vmor %vm1556, %vm1557
  %v1559 = vsel %vm1558, %v1550, %v1555
  %v1560 = vmul.f32 %v1509, %v1539
  %v1561 = vmul.f32 %v1510, %v1549
  %v1562 = vmul.f32 %v1511, %v1559
  %v1563 = vperm.slane %v957, 2
  %v1564 = vmul.f32 %v1560, %v1563
  %v1565 = vmul.f32 %v1561, %v1563
  %v1566 = vmul.f32 %v1562, %v1563
  %v1567 = vperm.slane %v957, 3
  %v1568 = vadd.f32 %v1564, %v1567
  %v1569 = vadd.f32 %v1565, %v1567
  %v1570 = vadd.f32 %v1566, %v1567
  %v1571 = vpack.c.bf16 %v1569, %v1568
  %v1572 = vpack.c.bf16 %v1570, %v1570
  %s1573 = scalar_lea.vmem %s9, 16
  %v1574 = vld [vmem:[%s1573] sm:$0xf]
  %v1575 = vld [vmem:[%s1573 + $0x4] sm:$0xf]
  %v1576 = vld [vmem:[%s1573 + $0x8] sm:$0xf]
  %v1577 = vld [vmem:[%s1573 + $0xc] sm:$0xf]
  %s1578 = scalar_lea.vmem %s10, 1
  %v1579 = vld [vmem:[%s1578] sm:$0x1]
  %v1581 = vperm.slane %v1579, 0
  %v1587 = vunpack.c.l.b16 %v1574
  %v1588 = vunpack.c.l.b16 %v1575
  %v1589 = vunpack.c.l.b16 %v1576
  %v1590 = vunpack.c.l.b16 %v1577
  %v1591 = vpack.c.b16 %v1588, %v1587
  %v1592 = vpack.c.b16 %v1590, %v1589
  %v1596 = vsel %vm154, %v1571, 0
  %v1599 = vsel %vm154, %v1572, 0
  %1601 = vmatpush.bf16.msra.mxu0 0
  %1602 = vmatpush.bf16.msra.mxu0 0
  %1603 = vmatpush.bf16.msra.mxu0 0
  %1604 = vmatpush.bf16.msra.mxu0 0
  %1605 = vmatpush.bf16.msra.mxu0 0
  %1606 = vmatpush.bf16.msra.mxu0 0
  %1607 = vmatpush.bf16.msra.mxu0 %v1592
  %1608 = vmatpush.bf16.msra.mxu0 %v1591
  %1609 = vmatmul.bf16.gmra.mxu0 %v1596
  %v1610 = vpop.f32.mrf.mxu0
  %v1611 = vadd.f32 %v1581, %v1610
  %v1612 = vpop.f32.mrf.mxu0
  %v1613 = vadd.f32 %v1581, %v1612
  %1614 = vmatmul.bf16.gmra.mxu0 %v1599
  %v1615 = vpop.f32.mrf.mxu0
  %v1616 = vadd.f32 %v1581, %v1615
  %v1617 = vpop.f32.mrf.mxu0
  %1618 = vdwg.mxu0
  %v1619 = vmax.f32 %v1611, 0.0
  %v1620 = vmax.f32 %v1613, 0.0
  %v1621 = vmax.f32 %v1616, 0.0
  %v1622 = vpack.c.bf16 %v1620, %v1619
  %v1623 = vpack.c.bf16 %v1621, %v1621
  %s1624 = scalar_lea.vmem %s11, 32
  %v1625 = vld [vmem:[%s1624] sm:$0xf]
  %v1626 = vld [vmem:[%s1624 + $0x4] sm:$0xf]
  %v1627 = vld [vmem:[%s1624 + $0x8] sm:$0xf]
  %v1628 = vld [vmem:[%s1624 + $0xc] sm:$0xf]
  %v1629 = vld [vmem:[%s1624 + $0x10] sm:$0xf]
  %v1630 = vld [vmem:[%s1624 + $0x14] sm:$0xf]
  %v1631 = vld [vmem:[%s1624 + $0x18] sm:$0xf]
  %v1632 = vld [vmem:[%s1624 + $0x1c] sm:$0xf]
  %v1633 = vperm.slane %v957, 1
  %v1642 = vunpack.c.l.b16 %v1625
  %v1643 = vunpack.c.l.b16 %v1626
  %v1644 = vunpack.c.l.b16 %v1627
  %v1645 = vunpack.c.l.b16 %v1628
  %v1646 = vunpack.c.l.b16 %v1629
  %v1647 = vunpack.c.l.b16 %v1630
  %v1648 = vunpack.c.l.b16 %v1631
  %v1649 = vunpack.c.l.b16 %v1632
  %v1650 = vpack.c.b16 %v1643, %v1642
  %v1651 = vpack.c.b16 %v1645, %v1644
  %v1652 = vpack.c.b16 %v1647, %v1646
  %v1653 = vpack.c.b16 %v1649, %v1648
  %v1659 = vsel %vm854, %v1622, 0
  %v1662 = vsel %vm854, %v1623, 0
  %1664 = vmatpush.bf16.msra.mxu0 0
  %1665 = vmatpush.bf16.msra.mxu0 0
  %1666 = vmatpush.bf16.msra.mxu0 0
  %1667 = vmatpush.bf16.msra.mxu0 0
  %1668 = vmatpush.bf16.msra.mxu0 %v1653
  %1669 = vmatpush.bf16.msra.mxu0 %v1652
  %1670 = vmatpush.bf16.msra.mxu0 %v1651
  %1671 = vmatpush.bf16.msra.mxu0 %v1650
  %1672 = vmatmul.bf16.gmra.mxu0 %v1659
  %v1673 = vpop.f32.mrf.mxu0
  %v1674 = vadd.f32 %v1633, %v1673
  %v1675 = vpop.f32.mrf.mxu0
  %v1676 = vadd.f32 %v1633, %v1675
  %1677 = vmatmul.bf16.gmra.mxu0 %v1662
  %v1678 = vpop.f32.mrf.mxu0
  %v1679 = vadd.f32 %v1633, %v1678
  %v1680 = vpop.f32.mrf.mxu0
  %1681 = vdwg.mxu0
  %v1682 = vadd.f32 %v1568, %v1674
  %v1683 = vadd.f32 %v1569, %v1676
  %v1684 = vadd.f32 %v1570, %v1679
  %v1685 = vsel %vm154, %v1682, 0.0
  %1686 = vadd.xlane.f32.xlu0 %v1685
  %v1687 = vpop.xlane.xlu0 %1686
  %v1688 = vsel %vm154, %v1683, 0.0
  %1689 = vadd.xlane.f32.xlu0 %v1688
  %v1690 = vpop.xlane.xlu0 %1689
  %v1691 = vsel %vm694, %v1684, 0.0
  %1692 = vadd.xlane.f32.xlu0 %v1691
  %v1693 = vpop.xlane.xlu0 %1692
  %v1694 = vmul.f32 %v1687, %v704
  %v1695 = vmul.f32 %v1690, %v704
  %v1696 = vmul.f32 %v1693, %v704
  %v1697 = vsub.f32 %v1682, %v1694
  %v1698 = vsub.f32 %v1683, %v1695
  %v1699 = vsub.f32 %v1684, %v1696
  %v1700 = vmul.f32 %v1697, %v1697
  %v1701 = vmul.f32 %v1698, %v1698
  %v1702 = vmul.f32 %v1699, %v1699
  %v1703 = vsel %vm154, %v1700, 0.0
  %1704 = vadd.xlane.f32.xlu0 %v1703
  %v1705 = vpop.xlane.xlu0 %1704
  %v1706 = vsel %vm154, %v1701, 0.0
  %1707 = vadd.xlane.f32.xlu0 %v1706
  %v1708 = vpop.xlane.xlu0 %1707
  %v1709 = vsel %vm694, %v1702, 0.0
  %1710 = vadd.xlane.f32.xlu0 %v1709
  %v1711 = vpop.xlane.xlu0 %1710
  %v1712 = vmul.f32 %v1705, %v704
  %v1713 = vmul.f32 %v1708, %v704
  %v1714 = vmul.f32 %v1711, %v704
  %v1715 = vadd.f32 %v1712, 1e-05
  %v1716 = vadd.f32 %v1713, 1e-05
  %v1717 = vadd.f32 %v1714, 1e-05
  %v1718 = vrsqrt.pop %v1715
  %v1719 = vmul.f32 %v1718, %v1715
  %v1720 = vmul.f32 %v1719, %v1718
  %v1721 = vmul.f32 0.5, %v1720
  %v1722 = vsub.f32 1.5, %v1721
  %v1723 = vmul.f32 %v1718, %v1722
  %vm1724 = vweird.f32 %v1715
  %vm1725 = vweird.f32 %v1718
  %vm1726 = vmor %vm1724, %vm1725
  %v1727 = vsel %vm1726, %v1718, %v1723
  %v1728 = vrsqrt.pop %v1716
  %v1729 = vmul.f32 %v1728, %v1716
  %v1730 = vmul.f32 %v1729, %v1728
  %v1731 = vmul.f32 0.5, %v1730
  %v1732 = vsub.f32 1.5, %v1731
  %v1733 = vmul.f32 %v1728, %v1732
  %vm1734 = vweird.f32 %v1716
  %vm1735 = vweird.f32 %v1728
  %vm1736 = vmor %vm1734, %vm1735
  %v1737 = vsel %vm1736, %v1728, %v1733
  %v1738 = vrsqrt.pop %v1717
  %v1739 = vmul.f32 %v1738, %v1717
  %v1740 = vmul.f32 %v1739, %v1738
  %v1741 = vmul.f32 0.5, %v1740
  %v1742 = vsub.f32 1.5, %v1741
  %v1743 = vmul.f32 %v1738, %v1742
  %vm1744 = vweird.f32 %v1717
  %vm1745 = vweird.f32 %v1738
  %vm1746 = vmor %vm1744, %vm1745
  %v1747 = vsel %vm1746, %v1738, %v1743
  %v1748 = vmul.f32 %v1697, %v1727
  %v1749 = vmul.f32 %v1698, %v1737
  %v1750 = vmul.f32 %v1699, %v1747
  %v1751 = vperm.slane %v957, 4
  %v1752 = vmul.f32 %v1748, %v1751
  %v1753 = vmul.f32 %v1749, %v1751
  %v1754 = vmul.f32 %v1750, %v1751
  %v1755 = vperm.slane %v957, 5
  %v1756 = vadd.f32 %v1752, %v1755
  %v1757 = vadd.f32 %v1753, %v1755
  %v1758 = vadd.f32 %v1754, %v1755
  %v1759 = vld [vmem:[%s5] sm:$0x3]
  %v1761 = vsel %vm225, %v1759, 0
  %v1764 = vsel %vm109, %v1758, 0
  %1766 = vmatpush.msra.mxu0 0.0
  %1767 = vmatpush.msra.mxu0 0.0
  %1768 = vmatpush.msra.mxu0 0.0
  %1769 = vmatpush.msra.mxu0 0.0
  %1770 = vmatpush.msra.mxu0 0.0
  %1771 = vmatpush.msra.mxu0 0.0
  %1772 = vmatpush.msra.mxu0 0.0
  %1773 = vmatpush.msra.mxu0 0.0
  %1774 = vmatpush.msra.mxu0 0.0
  %1775 = vmatpush.msra.mxu0 0.0
  %1776 = vmatpush.msra.mxu0 0.0
  %1777 = vmatpush.msra.mxu0 0.0
  %1778 = vmatpush.msra.mxu0 0.0
  %1779 = vmatpush.msra.mxu0 %v1764
  %1780 = vmatpush.msra.mxu0 %v1757
  %1781 = vmatpush.msra.mxu0 %v1756
  %1782 = vmatmul.f32.gmra.mxu0 %v1761
  %v1783 = vpop.f32.mrf.mxu0
  %v1784 = vadd.f32 0.0, %v1783
  %1785 = vdwg.mxu0
  %v1786 = vpack.c.bf16 %v1784, %v1784
  %v1787 = vld [vmem:[%s13] sm:$0xf]
  %v1788 = vld [vmem:[%s13 + $0x4] sm:$0xf]
  %v1789 = vld [vmem:[%s13 + $0x8] sm:$0xf]
  %v1790 = vld [vmem:[%s13 + $0xc] sm:$0xf]
  %v1791 = vld [vmem:[%s15] sm:$0x1]
  %v1793 = vperm.slane %v1791, 0
  %v1799 = vunpack.c.l.b16 %v1787
  %v1800 = vunpack.c.l.b16 %v1788
  %v1801 = vunpack.c.l.b16 %v1789
  %v1802 = vunpack.c.l.b16 %v1790
  %v1803 = vpack.c.b16 %v1800, %v1799
  %v1804 = vpack.c.b16 %v1802, %v1801
  %v1808 = vsel %vm154, %v1786, 0
  %1810 = vmatpush.bf16.msra.mxu0 0
  %1811 = vmatpush.bf16.msra.mxu0 0
  %1812 = vmatpush.bf16.msra.mxu0 0
  %1813 = vmatpush.bf16.msra.mxu0 0
  %1814 = vmatpush.bf16.msra.mxu0 0
  %1815 = vmatpush.bf16.msra.mxu0 0
  %1816 = vmatpush.bf16.msra.mxu0 %v1804
  %1817 = vmatpush.bf16.msra.mxu0 %v1803
  %1818 = vmatmul.bf16.gmra.mxu0 %v1808
  %v1819 = vpop.f32.mrf.mxu0
  %v1820 = vadd.f32 %v1793, %v1819
  %v1821 = vpop.f32.mrf.mxu0
  %1822 = vdwg.mxu0
  %v1823 = vmax.f32 %v1820, 0.0
  %v1824 = vpack.c.bf16 %v1823, %v1823
  %v1825 = vld [vmem:[%s14] sm:$0xf]
  %v1826 = vld [vmem:[%s14 + $0x4] sm:$0xf]
  %v1827 = vld [vmem:[%s14 + $0x8] sm:$0xf]
  %v1828 = vld [vmem:[%s14 + $0xc] sm:$0xf]
  %v1829 = vld [vmem:[%s14 + $0x10] sm:$0xf]
  %v1830 = vld [vmem:[%s14 + $0x14] sm:$0xf]
  %v1831 = vld [vmem:[%s14 + $0x18] sm:$0xf]
  %v1832 = vld [vmem:[%s14 + $0x1c] sm:$0xf]
  %v1833 = vld [vmem:[%s14 + $0x20] sm:$0xf]
  %v1834 = vld [vmem:[%s14 + $0x24] sm:$0xf]
  %v1835 = vld [vmem:[%s14 + $0x28] sm:$0xf]
  %v1836 = vld [vmem:[%s14 + $0x2c] sm:$0xf]
  %v1837 = vld [vmem:[%s14 + $0x30] sm:$0xf]
  %v1838 = vld [vmem:[%s14 + $0x34] sm:$0xf]
  %v1839 = vld [vmem:[%s14 + $0x38] sm:$0xf]
  %v1840 = vld [vmem:[%s14 + $0x3c] sm:$0xf]
  %s1841 = scalar_lea.vmem %s15, 1
  %v1842 = vld [vmem:[%s1841] sm:$0x1]
  %v1844 = vperm.slane %v1842, 0
  %v1862 = vunpack.c.l.b16 %v1825
  %v1863 = vunpack.c.l.b16 %v1826
  %v1864 = vunpack.c.l.b16 %v1827
  %v1865 = vunpack.c.l.b16 %v1828
  %v1866 = vunpack.c.l.b16 %v1829
  %v1867 = vunpack.c.l.b16 %v1830
  %v1868 = vunpack.c.l.b16 %v1831
  %v1869 = vunpack.c.l.b16 %v1832
  %v1870 = vunpack.c.l.b16 %v1833
  %v1871 = vunpack.c.l.b16 %v1834
  %v1872 = vunpack.c.l.b16 %v1835
  %v1873 = vunpack.c.l.b16 %v1836
  %v1874 = vunpack.c.l.b16 %v1837
  %v1875 = vunpack.c.l.b16 %v1838
  %v1876 = vunpack.c.l.b16 %v1839
  %v1877 = vunpack.c.l.b16 %v1840
  %v1878 = vpack.c.b16 %v1863, %v1862
  %v1879 = vpack.c.b16 %v1865, %v1864
  %v1880 = vpack.c.b16 %v1867, %v1866
  %v1881 = vpack.c.b16 %v1869, %v1868
  %v1882 = vpack.c.b16 %v1871, %v1870
  %v1883 = vpack.c.b16 %v1873, %v1872
  %v1884 = vpack.c.b16 %v1875, %v1874
  %v1885 = vpack.c.b16 %v1877, %v1876
  %1894 = vmatpush.bf16.msra.mxu0 %v1885
  %1895 = vmatpush.bf16.msra.mxu0 %v1884
  %1896 = vmatpush.bf16.msra.mxu0 %v1883
  %1897 = vmatpush.bf16.msra.mxu0 %v1882
  %1898 = vmatpush.bf16.msra.mxu0 %v1881
  %1899 = vmatpush.bf16.msra.mxu0 %v1880
  %1900 = vmatpush.bf16.msra.mxu0 %v1879
  %1901 = vmatpush.bf16.msra.mxu0 %v1878
  %1902 = vmatmul.bf16.gmra.mxu0 %v1824
  %v1903 = vpop.f32.mrf.mxu0
  %v1904 = vadd.f32 %v1844, %v1903
  %v1905 = vpop.f32.mrf.mxu0
  %1906 = vdwg.mxu0
  %v1907 = vmax.f32 %v1904, 0.0
  %1908 = vst [vmem:[%s16] sm:$0x3] %v1907
  // Predicated region
  $region66: #{cls_transformer_forward.1} parent=0 // pred_check
    _
  $region67: #{cls_transformer_forward.1} parent=0 // pred_check_branch
    %1910 = sbr.rel (0) target = $region69
  $region68: #{cls_transformer_forward.1} parent=0 // pred_region
    _
  $region69: #{cls_transformer_forward.1} parent=0 // pred_fallthru
    _
  // Predicated region
  $region70: #{cls_transformer_forward.1} parent=0 // pred_check
    _
  $region71: #{cls_transformer_forward.1} parent=0 // pred_check_branch
    %1912 = sbr.rel (0) target = $region73
  $region72: #{cls_transformer_forward.1} parent=0 // pred_region
    _
  $region73: #{cls_transformer_forward.1} parent=0 // pred_fallthru
    _

</llo_original>
